<compile_context>
chip_gen: v7x
topology: tpu7x:2x2x1
jax: 0.10.0
libtpu: 0.0.40
codegen_flags: <defaults>
</compile_context>

<pallas_src>
import jax
import jax.numpy as jnp
from jax.experimental import pallas as pl
from jax.experimental.pallas import tpu as pltpu

D_IN, H1, H2, D_OUT = 8, 512, 256, 4
OUT_PAD = 128          # lane-dense padded width for the 4-wide layer-3 output
MAX_TILE_B = 1024      # keeps per-tile footprint (<~4.5 MiB) well under scoped VMEM


def _num_tensorcores() -> int:
    """2 for megacore-style chips (v7x / v4), else 1. Fallback: 1."""
    try:
        kind = jax.devices()[0].device_kind.lower()
    except Exception:  # pragma: no cover - defensive
        return 1
    return 2 if ("v7" in kind or "v4" in kind) else 1


def _pick_tile_b(batch: int, n_tc: int) -> int:
    """One tile per TensorCore, multiple of 128, capped for VMEM headroom."""
    tile = pl.cdiv(batch, n_tc)
    tile = pl.cdiv(tile, 128) * 128
    return max(128, min(tile, MAX_TILE_B))


def _mlp_kernel(x_ref, w1_ref, b1_ref, w2_ref, b2_ref, w3_ref, b3_ref, o_ref):
    # layer 1: (TB,8)bf16 @ (8,512)bf16 -> f32 accum; bias+ReLU in f32 (VPU)
    h1 = jnp.dot(x_ref[...], w1_ref[...], preferred_element_type=jnp.float32)
    h1 = jnp.maximum(h1 + b1_ref[...], 0.0)
    # layer 2: (TB,512)bf16 @ (512,256)bf16 -> f32 accum; bias+ReLU in f32
    h2 = jnp.dot(h1.astype(jnp.bfloat16), w2_ref[...],
                 preferred_element_type=jnp.float32)
    h2 = jnp.maximum(h2 + b2_ref[...], 0.0)
    # layer 3: (TB,256)bf16 @ (256,128)bf16 -> f32; bf16 lane-dense 128-wide store
    o = jnp.dot(h2.astype(jnp.bfloat16), w3_ref[...],
                preferred_element_type=jnp.float32)
    o_ref[...] = (o + b3_ref[...]).astype(o_ref.dtype)


def prepare_params(params):
    """One-time host-side prep: bf16 weights + lane-pad layer 3 to 128 outputs."""
    w1 = params["w1"].astype(jnp.bfloat16)                       # (8, 512)
    w2 = params["w2"].astype(jnp.bfloat16)                       # (512, 256)
    w3 = params["w3"].astype(jnp.bfloat16)                       # (256, 4)
    w3p = jnp.zeros((H2, OUT_PAD), jnp.bfloat16).at[:, :D_OUT].set(w3)
    b3p = jnp.zeros((1, OUT_PAD), jnp.float32).at[:, :D_OUT].set(params["b3"])
    return {"w1": w1, "b1": params["b1"],
            "w2": w2, "b2": params["b2"],
            "w3p": w3p, "b3p": b3p}


@jax.jit
def ann_forward(x, p):
    """x: (B, 8) float32. p: output of prepare_params. Returns (B, 4) float32."""
    B = x.shape[0]
    n_tc = _num_tensorcores()
    tile_b = _pick_tile_b(B, n_tc)
    B_pad = pl.cdiv(B, tile_b) * tile_b

    xb = x.astype(jnp.bfloat16)                 # halve x DMA; layer-1 MXU is bf16 anyway
    if B_pad != B:
        xb = jnp.pad(xb, ((0, B_pad - B), (0, 0)))
    grid = (B_pad // tile_b,)

    flops = 2 * B_pad * (D_IN * H1 + H1 * H2 + H2 * OUT_PAD)
    bytes_accessed = (
        B_pad * D_IN * 2                                   # x (bf16 in)
        + (D_IN * H1 + H1 * H2 + H2 * OUT_PAD) * 2         # bf16 weights
        + (H1 + H2 + OUT_PAD) * 4                          # f32 biases
        + B_pad * OUT_PAD * 2                              # bf16 out
    )
    cost = pl.CostEstimate(flops=flops, transcendentals=0,
                           bytes_accessed=bytes_accessed)

    out = pl.pallas_call(
        _mlp_kernel,
        out_shape=jax.ShapeDtypeStruct((B_pad, OUT_PAD), jnp.bfloat16),
        grid=grid,
        in_specs=[
            pl.BlockSpec((tile_b, D_IN), lambda i: (i, 0)),   # x tile
            pl.BlockSpec((D_IN, H1), lambda i: (0, 0)),       # w1 (resident)
            pl.BlockSpec((1, H1), lambda i: (0, 0)),          # b1
            pl.BlockSpec((H1, H2), lambda i: (0, 0)),         # w2
            pl.BlockSpec((1, H2), lambda i: (0, 0)),          # b2
            pl.BlockSpec((H2, OUT_PAD), lambda i: (0, 0)),    # w3 (padded)
            pl.BlockSpec((1, OUT_PAD), lambda i: (0, 0)),     # b3 (padded)
        ],
        out_specs=pl.BlockSpec((tile_b, OUT_PAD), lambda i: (i, 0)),
        compiler_params=pltpu.CompilerParams(
            dimension_semantics=("parallel",)),               # shards grid across TCs
        cost_estimate=cost,
    )(xb, p["w1"], p["b1"], p["w2"], p["b2"], p["w3p"], p["b3p"])

    return out[:B, :D_OUT].astype(jnp.float32)


def init_params(key):
    """Deterministic synthetic init matching nn.Linear shapes (8->512->256->4)."""
    ks = jax.random.split(key, 6)

    def linear(kw, kb, fan_in, fan_out):
        # PyTorch default: U(-1/sqrt(fan_in), 1/sqrt(fan_in))
        bound = 1.0 / jnp.sqrt(jnp.float32(fan_in))
        w = jax.random.uniform(kw, (fan_in, fan_out), jnp.float32, -bound, bound)
        b = jax.random.uniform(kb, (1, fan_out), jnp.float32, -bound, bound)
        return w, b

    w1, b1 = linear(ks[0], ks[1], D_IN, H1)
    w2, b2 = linear(ks[2], ks[3], H1, H2)
    w3, b3 = linear(ks[4], ks[5], H2, D_OUT)
    return {"w1": w1, "b1": b1, "w2": w2, "b2": b2, "w3": w3, "b3": b3}


def _ref_forward(x, p):
    """Pure-JAX reference using the same bf16-weight / f32-accumulate recipe."""
    h1 = jnp.dot(x.astype(jnp.bfloat16), p["w1"],
                 preferred_element_type=jnp.float32) + p["b1"]
    h1 = jnp.maximum(h1, 0.0)
    h2 = jnp.dot(h1.astype(jnp.bfloat16), p["w2"],
                 preferred_element_type=jnp.float32) + p["b2"]
    h2 = jnp.maximum(h2, 0.0)
    o = jnp.dot(h2.astype(jnp.bfloat16), p["w3p"],
                preferred_element_type=jnp.float32) + p["b3p"]
    return o[:, :D_OUT].astype(jnp.bfloat16).astype(jnp.float32)


if __name__ == "__main__":
    key = jax.random.PRNGKey(0)
    k_params, k_x = jax.random.split(key)

    params = init_params(k_params)
    prepped = prepare_params(params)

    # 256 states of dim 8: one 256-row tile on v5e/v6e, two 128-row tiles (one
    # per TensorCore) on v7x.
    B = 256
    x = jax.random.normal(k_x, (B, D_IN), jnp.float32)

    q_values = ann_forward(x, prepped)
    jax.block_until_ready(q_values)

    ref = _ref_forward(x, prepped)
    assert q_values.shape == (B, D_OUT)
    assert jnp.allclose(q_values, ref, atol=2e-2, rtol=2e-2), \
        float(jnp.max(jnp.abs(q_values - ref)))

    print("KERNEL_OK")
</pallas_src>

<mosaic_0001>
module attributes {stable_mosaic.version = 11 : i64} {
  func.func @_mlp_kernel(%arg0: i32, %arg1: memref<256x8xbf16, #tpu.memory_space<vmem>>, %arg2: memref<8x512xbf16, #tpu.memory_space<vmem>>, %arg3: memref<1x512xf32, #tpu.memory_space<vmem>>, %arg4: memref<512x256xbf16, #tpu.memory_space<vmem>>, %arg5: memref<1x256xf32, #tpu.memory_space<vmem>>, %arg6: memref<256x128xbf16, #tpu.memory_space<vmem>>, %arg7: memref<1x128xf32, #tpu.memory_space<vmem>>, %arg8: memref<256x128xbf16, #tpu.memory_space<vmem>>) attributes {dimension_semantics = [#tpu.dimension_semantics<parallel>], iteration_bounds = array<i64: 1>, scalar_prefetch = 0 : i64, scratch_operands = 0 : i64, tpu.core_type = #tpu.core_type<tc>, window_params = [{transform_indices = @transform_0, window_bounds = array<i64: 256, 8>}, {pipeline_mode = #tpu.pipeline_mode<synchronous>, transform_indices = @transform_1, window_bounds = array<i64: 8, 512>}, {pipeline_mode = #tpu.pipeline_mode<synchronous>, transform_indices = @transform_2, window_bounds = array<i64: 1, 512>}, {pipeline_mode = #tpu.pipeline_mode<synchronous>, transform_indices = @transform_3, window_bounds = array<i64: 512, 256>}, {pipeline_mode = #tpu.pipeline_mode<synchronous>, transform_indices = @transform_4, window_bounds = array<i64: 1, 256>}, {pipeline_mode = #tpu.pipeline_mode<synchronous>, transform_indices = @transform_5, window_bounds = array<i64: 256, 128>}, {pipeline_mode = #tpu.pipeline_mode<synchronous>, transform_indices = @transform_6, window_bounds = array<i64: 1, 128>}, {transform_indices = @transform_7, window_bounds = array<i64: 256, 128>}]} {
    %c0 = arith.constant 0 : index
    %c0_0 = arith.constant 0 : index
    %0 = vector.load %arg1[%c0, %c0_0] : memref<256x8xbf16, #tpu.memory_space<vmem>>, vector<256x8xbf16>
    %c0_1 = arith.constant 0 : index
    %c0_2 = arith.constant 0 : index
    %1 = vector.load %arg2[%c0_1, %c0_2] : memref<8x512xbf16, #tpu.memory_space<vmem>>, vector<8x512xbf16>
    %cst = arith.constant dense<0.000000e+00> : vector<256x512xf32>
    %2 = tpu.matmul %0, %1, %cst {dimension_numbers = #tpu.dot_dimension_numbers<[1], [0], [0], [1], [0, 0, 1, 1], [], []>} : vector<256x8xbf16>, vector<8x512xbf16>, vector<256x512xf32> -> vector<256x512xf32>
    %c0_3 = arith.constant 0 : index
    %c0_4 = arith.constant 0 : index
    %3 = vector.load %arg3[%c0_3, %c0_4] : memref<1x512xf32, #tpu.memory_space<vmem>>, vector<1x512xf32>
    %4 = vector.broadcast %3 : vector<1x512xf32> to vector<256x512xf32>
    %5 = arith.addf %2, %4 : vector<256x512xf32>
    %cst_5 = arith.constant 0.000000e+00 : f32
    %6 = vector.broadcast %cst_5 : f32 to vector<256x512xf32>
    %7 = arith.maximumf %5, %6 : vector<256x512xf32>
    %8 = arith.truncf %7 : vector<256x512xf32> to vector<256x512xbf16>
    %c0_6 = arith.constant 0 : index
    %c0_7 = arith.constant 0 : index
    %9 = vector.load %arg4[%c0_6, %c0_7] : memref<512x256xbf16, #tpu.memory_space<vmem>>, vector<512x256xbf16>
    %cst_8 = arith.constant dense<0.000000e+00> : vector<256x256xf32>
    %10 = tpu.matmul %8, %9, %cst_8 {dimension_numbers = #tpu.dot_dimension_numbers<[1], [0], [0], [1], [0, 0, 1, 1], [], []>} : vector<256x512xbf16>, vector<512x256xbf16>, vector<256x256xf32> -> vector<256x256xf32>
    %c0_9 = arith.constant 0 : index
    %c0_10 = arith.constant 0 : index
    %11 = vector.load %arg5[%c0_9, %c0_10] : memref<1x256xf32, #tpu.memory_space<vmem>>, vector<1x256xf32>
    %12 = vector.broadcast %11 : vector<1x256xf32> to vector<256x256xf32>
    %13 = arith.addf %10, %12 : vector<256x256xf32>
    %cst_11 = arith.constant 0.000000e+00 : f32
    %14 = vector.broadcast %cst_11 : f32 to vector<256x256xf32>
    %15 = arith.maximumf %13, %14 : vector<256x256xf32>
    %16 = arith.truncf %15 : vector<256x256xf32> to vector<256x256xbf16>
    %c0_12 = arith.constant 0 : index
    %c0_13 = arith.constant 0 : index
    %17 = vector.load %arg6[%c0_12, %c0_13] : memref<256x128xbf16, #tpu.memory_space<vmem>>, vector<256x128xbf16>
    %cst_14 = arith.constant dense<0.000000e+00> : vector<256x128xf32>
    %18 = tpu.matmul %16, %17, %cst_14 {dimension_numbers = #tpu.dot_dimension_numbers<[1], [0], [0], [1], [0, 0, 1, 1], [], []>} : vector<256x256xbf16>, vector<256x128xbf16>, vector<256x128xf32> -> vector<256x128xf32>
    %c0_15 = arith.constant 0 : index
    %c0_16 = arith.constant 0 : index
    %19 = vector.load %arg7[%c0_15, %c0_16] : memref<1x128xf32, #tpu.memory_space<vmem>>, vector<1x128xf32>
    %20 = vector.broadcast %19 : vector<1x128xf32> to vector<256x128xf32>
    %21 = arith.addf %18, %20 : vector<256x128xf32>
    %22 = arith.truncf %21 : vector<256x128xf32> to vector<256x128xbf16>
    %c0_17 = arith.constant 0 : index
    %c0_18 = arith.constant 0 : index
    %23 = vector.load %arg8[%c0_17, %c0_18] : memref<256x128xbf16, #tpu.memory_space<vmem>>, vector<256x128xbf16>
    tpu.vector_store %arg8[%c0_17, %c0_18], %22 {strides = array<i32>} : memref<256x128xbf16, #tpu.memory_space<vmem>>, vector<256x128xbf16>,
    return
  }
  func.func @transform_0(%arg0: i32) -> (i32, i32) {
    %c0_i32 = arith.constant 0 : i32
    %c0_i32_0 = arith.constant 0 : i32
    return %arg0, %c0_i32 : i32, i32
  }
  func.func @transform_1(%arg0: i32) -> (i32, i32) {
    %c0_i32 = arith.constant 0 : i32
    %c0_i32_0 = arith.constant 0 : i32
    %c0_i32_1 = arith.constant 0 : i32
    return %c0_i32, %c0_i32_0 : i32, i32
  }
  func.func @transform_2(%arg0: i32) -> (i32, i32) {
    %c0_i32 = arith.constant 0 : i32
    %c0_i32_0 = arith.constant 0 : i32
    %c0_i32_1 = arith.constant 0 : i32
    return %c0_i32, %c0_i32_0 : i32, i32
  }
  func.func @transform_3(%arg0: i32) -> (i32, i32) {
    %c0_i32 = arith.constant 0 : i32
    %c0_i32_0 = arith.constant 0 : i32
    %c0_i32_1 = arith.constant 0 : i32
    return %c0_i32, %c0_i32_0 : i32, i32
  }
  func.func @transform_4(%arg0: i32) -> (i32, i32) {
    %c0_i32 = arith.constant 0 : i32
    %c0_i32_0 = arith.constant 0 : i32
    %c0_i32_1 = arith.constant 0 : i32
    return %c0_i32, %c0_i32_0 : i32, i32
  }
  func.func @transform_5(%arg0: i32) -> (i32, i32) {
    %c0_i32 = arith.constant 0 : i32
    %c0_i32_0 = arith.constant 0 : i32
    %c0_i32_1 = arith.constant 0 : i32
    return %c0_i32, %c0_i32_0 : i32, i32
  }
  func.func @transform_6(%arg0: i32) -> (i32, i32) {
    %c0_i32 = arith.constant 0 : i32
    %c0_i32_0 = arith.constant 0 : i32
    %c0_i32_1 = arith.constant 0 : i32
    return %c0_i32, %c0_i32_0 : i32, i32
  }
  func.func @transform_7(%arg0: i32) -> (i32, i32) {
    %c0_i32 = arith.constant 0 : i32
    %c0_i32_0 = arith.constant 0 : i32
    return %arg0, %c0_i32 : i32, i32
  }
}

</mosaic_0001>

<llo_original>
// kernel: ann_forward.1
$region0: #{ann_forward.1}
  #allocation0 [shape = 'u32[]', space=smem, size = 0x4, offset = 0x4, fixed_abs, tag = 'smem constant byte address 0x4 - core index']
  #allocation1 [shape = 'u32[144,128]{1,0:T(1,128)}', space=vmem, size = 0x12000, scoped, tag = 'internal scratch']
  %s0 = inlined_call_operand.vmem [shape: bf16[256,8], index: 0, kind: input, shape index: {}]
  %s1 = inlined_call_operand.vmem [shape: bf16[8,512], index: 1, kind: input, shape index: {}]
  %s2 = inlined_call_operand.vmem [shape: f32[1,512], index: 2, kind: input, shape index: {}]
  %s3 = inlined_call_operand.hbm [shape: bf16[512,256], index: 3, kind: input, shape index: {}]
  %s4 = inlined_call_operand.vmem [shape: f32[1,256], index: 4, kind: input, shape index: {}]
  %s5 = inlined_call_operand.vmem [shape: bf16[256,128], index: 5, kind: input, shape index: {}]
  %s6 = inlined_call_operand.vmem [shape: f32[1,128], index: 6, kind: input, shape index: {}]
  %s7 = inlined_call_operand.vmem [shape: bf16[256,128], index: 7, kind: output, shape index: {}]
  %s8 = sld [smem:[#allocation0]]
  $region42: #{ann_forward.1} parent=0
    _
  %s10 = ssub.s32 1, %s8
  %s11 = scalar_select 0, %s10, %s8
  $region1: #{ann_forward.1} parent=0
    #allocation2 [shape = 'u8[262144]{0}', space=vmem, size = 0x40000, scoped, tag = 'input window, operand 3, single buffered']
    #allocation3 [shape = 's32[1]{0}', space=sflag, size = 0x4, scoped, tag = 'scoped memory for ann_forward.1']
    %12 = vsyncpa [#allocation3], 0
    // Predicated region
    $region2: #{ann_forward.1} parent=1 // pred_check
      _
    $region3: #{ann_forward.1} parent=1 // pred_check_branch
      %14 = sbr.rel (0) target = $region5
    $region4: #{ann_forward.1} parent=1 // pred_region
      _
    $region5: #{ann_forward.1} parent=1 // pred_fallthru
      _
    // Predicated region
    $region6: #{ann_forward.1} parent=1 // pred_check
      _
    $region7: #{ann_forward.1} parent=1 // pred_check_branch
      %16 = sbr.rel (0) target = $region9
    $region8: #{ann_forward.1} parent=1 // pred_region
      _
    $region9: #{ann_forward.1} parent=1 // pred_fallthru
      _
    // Predicated region
    $region10: #{ann_forward.1} parent=1 // pred_check
      _
    $region11: #{ann_forward.1} parent=1 // pred_check_branch
      %18 = sbr.rel (0) target = $region13
    $region12: #{ann_forward.1} parent=1 // pred_region
      _
    $region13: #{ann_forward.1} parent=1 // pred_fallthru
      _
    // Predicated region
    $region14: #{ann_forward.1} parent=1 // pred_check
      _
    $region15: #{ann_forward.1} parent=1 // pred_check_branch
      %20 = sbr.rel (0) target = $region17
    $region16: #{ann_forward.1} parent=1 // pred_region
      %s22 = ssub.s32 8192, 8192
      %23 = vsyncadd [#allocation3], %s22
      %s24 = sshll.u32 [#allocation2], 4
      %s25 = int_to_ptr.vmem [resolvable:$true] %s24
      %30 = dma.hbm_to_vmem [thread:$0]  %s3, 8192, %s25, [#allocation3], 128, 128, 8
    $region17: #{ann_forward.1} parent=1 // pred_fallthru
      _
    // Predicated region
    $region18: #{ann_forward.1} parent=1 // pred_check
      _
    $region19: #{ann_forward.1} parent=1 // pred_check_branch
      %32 = sbr.rel (0) target = $region21
    $region20: #{ann_forward.1} parent=1 // pred_region
      _
    $region21: #{ann_forward.1} parent=1 // pred_fallthru
      _
    // Predicated region
    $region22: #{ann_forward.1} parent=1 // pred_check
      _
    $region23: #{ann_forward.1} parent=1 // pred_check_branch
      %34 = sbr.rel (0) target = $region25
    $region24: #{ann_forward.1} parent=1 // pred_region
      _
    $region25: #{ann_forward.1} parent=1 // pred_fallthru
      _
    // Predicated region
    $region26: #{ann_forward.1} parent=1 // pred_check
      _
    $region27: #{ann_forward.1} parent=1 // pred_check_branch
      %36 = sbr.rel (0) target = $region29
    $region28: #{ann_forward.1} parent=1 // pred_region
      _
    $region29: #{ann_forward.1} parent=1 // pred_fallthru
      _
    // Predicated region
    $region30: #{ann_forward.1} parent=1 // pred_check
      _
    $region31: #{ann_forward.1} parent=1 // pred_check_branch
      %38 = sbr.rel (0) target = $region33
    $region32: #{ann_forward.1} parent=1 // pred_region
      %39 = dma.done [#allocation3], 8192
    $region33: #{ann_forward.1} parent=1 // pred_fallthru
      _
    %v41 = vld [vmem:[%s0] sm:$0xf]
    %v42 = vld [vmem:[%s0 + $0x4] sm:$0xf]
    %v43 = vld [vmem:[%s0 + $0x8] sm:$0xf]
    %v44 = vld [vmem:[%s0 + $0xc] sm:$0xf]
    %v45 = vld [vmem:[%s0 + $0x10] sm:$0xf]
    %v46 = vld [vmem:[%s0 + $0x14] sm:$0xf]
    %v47 = vld [vmem:[%s0 + $0x18] sm:$0xf]
    %v48 = vld [vmem:[%s0 + $0x1c] sm:$0xf]
    %v49 = vld [vmem:[%s0 + $0x20] sm:$0xf]
    %v50 = vld [vmem:[%s0 + $0x24] sm:$0xf]
    %v51 = vld [vmem:[%s0 + $0x28] sm:$0xf]
    %v52 = vld [vmem:[%s0 + $0x2c] sm:$0xf]
    %v53 = vld [vmem:[%s0 + $0x30] sm:$0xf]
    %v54 = vld [vmem:[%s0 + $0x34] sm:$0xf]
    %v55 = vld [vmem:[%s0 + $0x38] sm:$0xf]
    %v56 = vld [vmem:[%s0 + $0x3c] sm:$0xf]
    %v57 = vld [vmem:[%s0 + $0x40] sm:$0xf]
    %v58 = vld [vmem:[%s0 + $0x44] sm:$0xf]
    %v59 = vld [vmem:[%s0 + $0x48] sm:$0xf]
    %v60 = vld [vmem:[%s0 + $0x4c] sm:$0xf]
    %v61 = vld [vmem:[%s0 + $0x50] sm:$0xf]
    %v62 = vld [vmem:[%s0 + $0x54] sm:$0xf]
    %v63 = vld [vmem:[%s0 + $0x58] sm:$0xf]
    %v64 = vld [vmem:[%s0 + $0x5c] sm:$0xf]
    %v65 = vld [vmem:[%s0 + $0x60] sm:$0xf]
    %v66 = vld [vmem:[%s0 + $0x64] sm:$0xf]
    %v67 = vld [vmem:[%s0 + $0x68] sm:$0xf]
    %v68 = vld [vmem:[%s0 + $0x6c] sm:$0xf]
    %v69 = vld [vmem:[%s0 + $0x70] sm:$0xf]
    %v70 = vld [vmem:[%s0 + $0x74] sm:$0xf]
    %v71 = vld [vmem:[%s0 + $0x78] sm:$0xf]
    %v72 = vld [vmem:[%s0 + $0x7c] sm:$0xf]
    %v73 = vld [vmem:[%s1] sm:$0xff]
    %v74 = vld [vmem:[%s1 + $0x8] sm:$0xff]
    %v75 = vld [vmem:[%s2] sm:$0xf]
    %v77 = vlaneseq
    %v78 = vshrl.u32 %v77, 7
    %v79 = vsub.s32 0, %v78
    %v80 = vrot.slane %v75, %v79
    %v81 = vlaneseq
    %v82 = vshrl.u32 %v81, 7
    %v83 = vsub.s32 1, %v82
    %v84 = vrot.slane %v75, %v83
    %v85 = vlaneseq
    %v86 = vshrl.u32 %v85, 7
    %v87 = vsub.s32 2, %v86
    %v88 = vrot.slane %v75, %v87
    %v89 = vlaneseq
    %v90 = vshrl.u32 %v89, 7
    %v91 = vsub.s32 3, %v90
    %v92 = vrot.slane %v75, %v91
    %v129 = vunpack.c.l.b16 %v41
    %v130 = vunpack.c.l.b16 %v42
    %v131 = vunpack.c.l.b16 %v43
    %v132 = vunpack.c.l.b16 %v44
    %v133 = vunpack.c.l.b16 %v45
    %v134 = vunpack.c.l.b16 %v46
    %v135 = vunpack.c.l.b16 %v47
    %v136 = vunpack.c.l.b16 %v48
    %v137 = vunpack.c.l.b16 %v49
    %v138 = vunpack.c.l.b16 %v50
    %v139 = vunpack.c.l.b16 %v51
    %v140 = vunpack.c.l.b16 %v52
    %v141 = vunpack.c.l.b16 %v53
    %v142 = vunpack.c.l.b16 %v54
    %v143 = vunpack.c.l.b16 %v55
    %v144 = vunpack.c.l.b16 %v56
    %v145 = vunpack.c.l.b16 %v57
    %v146 = vunpack.c.l.b16 %v58
    %v147 = vunpack.c.l.b16 %v59
    %v148 = vunpack.c.l.b16 %v60
    %v149 = vunpack.c.l.b16 %v61
    %v150 = vunpack.c.l.b16 %v62
    %v151 = vunpack.c.l.b16 %v63
    %v152 = vunpack.c.l.b16 %v64
    %v153 = vunpack.c.l.b16 %v65
    %v154 = vunpack.c.l.b16 %v66
    %v155 = vunpack.c.l.b16 %v67
    %v156 = vunpack.c.l.b16 %v68
    %v157 = vunpack.c.l.b16 %v69
    %v158 = vunpack.c.l.b16 %v70
    %v159 = vunpack.c.l.b16 %v71
    %v160 = vunpack.c.l.b16 %v72
    %v161 = vpack.c.b16 %v130, %v129
    %v162 = vpack.c.b16 %v132, %v131
    %v163 = vpack.c.b16 %v134, %v133
    %v164 = vpack.c.b16 %v136, %v135
    %v165 = vpack.c.b16 %v138, %v137
    %v166 = vpack.c.b16 %v140, %v139
    %v167 = vpack.c.b16 %v142, %v141
    %v168 = vpack.c.b16 %v144, %v143
    %v169 = vpack.c.b16 %v146, %v145
    %v170 = vpack.c.b16 %v148, %v147
    %v171 = vpack.c.b16 %v150, %v149
    %v172 = vpack.c.b16 %v152, %v151
    %v173 = vpack.c.b16 %v154, %v153
    %v174 = vpack.c.b16 %v156, %v155
    %v175 = vpack.c.b16 %v158, %v157
    %v176 = vpack.c.b16 %v160, %v159
    %v179 = vunpack.c.l.b16 %v73
    %v180 = vunpack.c.h.b16 %v73
    %v181 = vunpack.c.l.b16 %v74
    %v182 = vunpack.c.h.b16 %v74
    %v183 = vpack.c.b16 %v179, %v179
    %v184 = vpack.c.b16 %v180, %v180
    %v185 = vpack.c.b16 %v181, %v181
    %v186 = vpack.c.b16 %v182, %v182
    %vm187 = vcmask 64512
    %v189 = vsel %vm187, %v161, 0
    %v192 = vsel %vm187, %v162, 0
    %v195 = vsel %vm187, %v163, 0
    %v198 = vsel %vm187, %v164, 0
    %v201 = vsel %vm187, %v165, 0
    %v204 = vsel %vm187, %v166, 0
    %v207 = vsel %vm187, %v167, 0
    %v210 = vsel %vm187, %v168, 0
    %v213 = vsel %vm187, %v169, 0
    %v216 = vsel %vm187, %v170, 0
    %v219 = vsel %vm187, %v171, 0
    %v222 = vsel %vm187, %v172, 0
    %v225 = vsel %vm187, %v173, 0
    %v228 = vsel %vm187, %v174, 0
    %v231 = vsel %vm187, %v175, 0
    %v234 = vsel %vm187, %v176, 0
    %vm236 = vcmask 1043456
    %v238 = vsel %vm236, %v183, 0
    %v241 = vsel %vm236, %v184, 0
    %v244 = vsel %vm236, %v185, 0
    %v247 = vsel %vm236, %v186, 0
    %249 = vmatprep.subr.bf16.mxu0 %v241
    %250 = vmatpush1.bf16.msra.mxu0 %v238
    %251 = vmatprep.subr.bf16.mxu0 0
    %252 = vmatpush1.bf16.msra.mxu0 0
    %253 = vmatprep.subr.bf16.mxu0 0
    %254 = vmatpush1.bf16.msra.mxu0 0
    %255 = vmatprep.subr.bf16.mxu0 0
    %256 = vmatpush1.bf16.msra.mxu0 0
    %257 = vmatprep.subr.bf16.mxu0 0
    %258 = vmatpush1.bf16.msra.mxu0 0
    %259 = vmatprep.subr.bf16.mxu0 0
    %260 = vmatpush1.bf16.msra.mxu0 0
    %261 = vmatprep.subr.bf16.mxu0 0
    %262 = vmatpush1.bf16.msra.mxu0 0
    %263 = vmatprep.subr.bf16.mxu0 0
    %264 = vmatpush1.bf16.msra.mxu0 0
    %265 = vmatprep.subr.bf16.mxu0 0
    %266 = vmatpush1.bf16.msra.mxu0 0
    %267 = vmatprep.subr.bf16.mxu0 0
    %268 = vmatpush1.bf16.msra.mxu0 0
    %269 = vmatprep.subr.bf16.mxu0 0
    %270 = vmatpush1.bf16.msra.mxu0 0
    %271 = vmatprep.subr.bf16.mxu0 0
    %272 = vmatpush1.bf16.msra.mxu0 0
    %273 = vmatprep.subr.bf16.mxu0 0
    %274 = vmatpush1.bf16.msra.mxu0 0
    %275 = vmatprep.subr.bf16.mxu0 0
    %276 = vmatpush1.bf16.msra.mxu0 0
    %277 = vmatprep.subr.bf16.mxu0 0
    %278 = vmatpush1.bf16.msra.mxu0 0
    %279 = vmatprep.subr.bf16.mxu0 0
    %280 = vmatpush1.bf16.msra.mxu0 0
    %281 = vmatprep.mubr.bf16.mxu0 0
    %282 = vmatmul.mubr.bf16.gmra.mrb[0].mxu0 %v189
    %v283 = vpop.f32.mrb[0].mxu0
    %v284 = vadd.f32 %v80, %v283
    %v285 = vpop.f32.mrb[0].mxu0
    %v286 = vadd.f32 %v84, %v285
    %v287 = vpop.f32.mrb[0].mxu0
    %v288 = vadd.f32 %v80, %v287
    %v289 = vpop.f32.mrb[0].mxu0
    %v290 = vadd.f32 %v84, %v289
    %291 = vmatprep.mubr.bf16.mxu0 0
    %292 = vmatmul.mubr.bf16.gmra.mrb[0].mxu0 %v192
    %v293 = vpop.f32.mrb[0].mxu0
    %v294 = vadd.f32 %v80, %v293
    %v295 = vpop.f32.mrb[0].mxu0
    %v296 = vadd.f32 %v84, %v295
    %v297 = vpop.f32.mrb[0].mxu0
    %v298 = vadd.f32 %v80, %v297
    %v299 = vpop.f32.mrb[0].mxu0
    %v300 = vadd.f32 %v84, %v299
    %301 = vmatprep.mubr.bf16.mxu0 0
    %302 = vmatmul.mubr.bf16.gmra.mrb[0].mxu0 %v195
    %v303 = vpop.f32.mrb[0].mxu0
    %v304 = vadd.f32 %v80, %v303
    %v305 = vpop.f32.mrb[0].mxu0
    %v306 = vadd.f32 %v84, %v305
    %v307 = vpop.f32.mrb[0].mxu0
    %v308 = vadd.f32 %v80, %v307
    %v309 = vpop.f32.mrb[0].mxu0
    %v310 = vadd.f32 %v84, %v309
    %311 = vmatprep.mubr.bf16.mxu0 0
    %312 = vmatmul.mubr.bf16.gmra.mrb[0].mxu0 %v198
    %v313 = vpop.f32.mrb[0].mxu0
    %v314 = vadd.f32 %v80, %v313
    %v315 = vpop.f32.mrb[0].mxu0
    %v316 = vadd.f32 %v84, %v315
    %v317 = vpop.f32.mrb[0].mxu0
    %v318 = vadd.f32 %v80, %v317
    %v319 = vpop.f32.mrb[0].mxu0
    %v320 = vadd.f32 %v84, %v319
    %321 = vmatprep.mubr.bf16.mxu0 0
    %322 = vmatmul.mubr.bf16.gmra.mrb[0].mxu0 %v201
    %v323 = vpop.f32.mrb[0].mxu0
    %v324 = vadd.f32 %v80, %v323
    %v325 = vpop.f32.mrb[0].mxu0
    %v326 = vadd.f32 %v84, %v325
    %v327 = vpop.f32.mrb[0].mxu0
    %v328 = vadd.f32 %v80, %v327
    %v329 = vpop.f32.mrb[0].mxu0
    %v330 = vadd.f32 %v84, %v329
    %331 = vmatprep.mubr.bf16.mxu0 0
    %332 = vmatmul.mubr.bf16.gmra.mrb[0].mxu0 %v204
    %v333 = vpop.f32.mrb[0].mxu0
    %v334 = vadd.f32 %v80, %v333
    %v335 = vpop.f32.mrb[0].mxu0
    %v336 = vadd.f32 %v84, %v335
    %v337 = vpop.f32.mrb[0].mxu0
    %v338 = vadd.f32 %v80, %v337
    %v339 = vpop.f32.mrb[0].mxu0
    %v340 = vadd.f32 %v84, %v339
    %341 = vmatprep.mubr.bf16.mxu0 0
    %342 = vmatmul.mubr.bf16.gmra.mrb[0].mxu0 %v207
    %v343 = vpop.f32.mrb[0].mxu0
    %v344 = vadd.f32 %v80, %v343
    %v345 = vpop.f32.mrb[0].mxu0
    %v346 = vadd.f32 %v84, %v345
    %v347 = vpop.f32.mrb[0].mxu0
    %v348 = vadd.f32 %v80, %v347
    %v349 = vpop.f32.mrb[0].mxu0
    %v350 = vadd.f32 %v84, %v349
    %351 = vmatprep.mubr.bf16.mxu0 0
    %352 = vmatmul.mubr.bf16.gmra.mrb[0].mxu0 %v210
    %v353 = vpop.f32.mrb[0].mxu0
    %v354 = vadd.f32 %v80, %v353
    %v355 = vpop.f32.mrb[0].mxu0
    %v356 = vadd.f32 %v84, %v355
    %v357 = vpop.f32.mrb[0].mxu0
    %v358 = vadd.f32 %v80, %v357
    %v359 = vpop.f32.mrb[0].mxu0
    %v360 = vadd.f32 %v84, %v359
    %361 = vmatprep.mubr.bf16.mxu0 0
    %362 = vmatmul.mubr.bf16.gmra.mrb[0].mxu0 %v213
    %v363 = vpop.f32.mrb[0].mxu0
    %v364 = vadd.f32 %v80, %v363
    %v365 = vpop.f32.mrb[0].mxu0
    %v366 = vadd.f32 %v84, %v365
    %v367 = vpop.f32.mrb[0].mxu0
    %v368 = vadd.f32 %v80, %v367
    %v369 = vpop.f32.mrb[0].mxu0
    %v370 = vadd.f32 %v84, %v369
    %371 = vmatprep.mubr.bf16.mxu0 0
    %372 = vmatmul.mubr.bf16.gmra.mrb[0].mxu0 %v216
    %v373 = vpop.f32.mrb[0].mxu0
    %v374 = vadd.f32 %v80, %v373
    %v375 = vpop.f32.mrb[0].mxu0
    %v376 = vadd.f32 %v84, %v375
    %v377 = vpop.f32.mrb[0].mxu0
    %v378 = vadd.f32 %v80, %v377
    %v379 = vpop.f32.mrb[0].mxu0
    %v380 = vadd.f32 %v84, %v379
    %381 = vmatprep.mubr.bf16.mxu0 0
    %382 = vmatmul.mubr.bf16.gmra.mrb[0].mxu0 %v219
    %v383 = vpop.f32.mrb[0].mxu0
    %v384 = vadd.f32 %v80, %v383
    %v385 = vpop.f32.mrb[0].mxu0
    %v386 = vadd.f32 %v84, %v385
    %v387 = vpop.f32.mrb[0].mxu0
    %v388 = vadd.f32 %v80, %v387
    %v389 = vpop.f32.mrb[0].mxu0
    %v390 = vadd.f32 %v84, %v389
    %391 = vmatprep.mubr.bf16.mxu0 0
    %392 = vmatmul.mubr.bf16.gmra.mrb[0].mxu0 %v222
    %v393 = vpop.f32.mrb[0].mxu0
    %v394 = vadd.f32 %v80, %v393
    %v395 = vpop.f32.mrb[0].mxu0
    %v396 = vadd.f32 %v84, %v395
    %v397 = vpop.f32.mrb[0].mxu0
    %v398 = vadd.f32 %v80, %v397
    %v399 = vpop.f32.mrb[0].mxu0
    %v400 = vadd.f32 %v84, %v399
    %401 = vmatprep.mubr.bf16.mxu0 0
    %402 = vmatmul.mubr.bf16.gmra.mrb[0].mxu0 %v225
    %v403 = vpop.f32.mrb[0].mxu0
    %v404 = vadd.f32 %v80, %v403
    %v405 = vpop.f32.mrb[0].mxu0
    %v406 = vadd.f32 %v84, %v405
    %v407 = vpop.f32.mrb[0].mxu0
    %v408 = vadd.f32 %v80, %v407
    %v409 = vpop.f32.mrb[0].mxu0
    %v410 = vadd.f32 %v84, %v409
    %411 = vmatprep.mubr.bf16.mxu0 0
    %412 = vmatmul.mubr.bf16.gmra.mrb[0].mxu0 %v228
    %v413 = vpop.f32.mrb[0].mxu0
    %v414 = vadd.f32 %v80, %v413
    %v415 = vpop.f32.mrb[0].mxu0
    %v416 = vadd.f32 %v84, %v415
    %v417 = vpop.f32.mrb[0].mxu0
    %v418 = vadd.f32 %v80, %v417
    %v419 = vpop.f32.mrb[0].mxu0
    %v420 = vadd.f32 %v84, %v419
    %421 = vmatprep.mubr.bf16.mxu0 0
    %422 = vmatmul.mubr.bf16.gmra.mrb[0].mxu0 %v231
    %v423 = vpop.f32.mrb[0].mxu0
    %v424 = vadd.f32 %v80, %v423
    %v425 = vpop.f32.mrb[0].mxu0
    %v426 = vadd.f32 %v84, %v425
    %v427 = vpop.f32.mrb[0].mxu0
    %v428 = vadd.f32 %v80, %v427
    %v429 = vpop.f32.mrb[0].mxu0
    %v430 = vadd.f32 %v84, %v429
    %431 = vmatprep.mubr.bf16.mxu0 0
    %432 = vmatmul.mubr.bf16.gmra.mrb[0].mxu0 %v234
    %v433 = vpop.f32.mrb[0].mxu0
    %v434 = vadd.f32 %v80, %v433
    %v435 = vpop.f32.mrb[0].mxu0
    %v436 = vadd.f32 %v84, %v435
    %v437 = vpop.f32.mrb[0].mxu0
    %v438 = vadd.f32 %v80, %v437
    %v439 = vpop.f32.mrb[0].mxu0
    %v440 = vadd.f32 %v84, %v439
    %441 = vdwg.mxu0
    %442 = vmatprep.subr.bf16.mxu0 %v247
    %443 = vmatpush1.bf16.msra.mxu0 %v244
    %444 = vmatprep.subr.bf16.mxu0 0
    %445 = vmatpush1.bf16.msra.mxu0 0
    %446 = vmatprep.subr.bf16.mxu0 0
    %447 = vmatpush1.bf16.msra.mxu0 0
    %448 = vmatprep.subr.bf16.mxu0 0
    %449 = vmatpush1.bf16.msra.mxu0 0
    %450 = vmatprep.subr.bf16.mxu0 0
    %451 = vmatpush1.bf16.msra.mxu0 0
    %452 = vmatprep.subr.bf16.mxu0 0
    %453 = vmatpush1.bf16.msra.mxu0 0
    %454 = vmatprep.subr.bf16.mxu0 0
    %455 = vmatpush1.bf16.msra.mxu0 0
    %456 = vmatprep.subr.bf16.mxu0 0
    %457 = vmatpush1.bf16.msra.mxu0 0
    %458 = vmatprep.subr.bf16.mxu0 0
    %459 = vmatpush1.bf16.msra.mxu0 0
    %460 = vmatprep.subr.bf16.mxu0 0
    %461 = vmatpush1.bf16.msra.mxu0 0
    %462 = vmatprep.subr.bf16.mxu0 0
    %463 = vmatpush1.bf16.msra.mxu0 0
    %464 = vmatprep.subr.bf16.mxu0 0
    %465 = vmatpush1.bf16.msra.mxu0 0
    %466 = vmatprep.subr.bf16.mxu0 0
    %467 = vmatpush1.bf16.msra.mxu0 0
    %468 = vmatprep.subr.bf16.mxu0 0
    %469 = vmatpush1.bf16.msra.mxu0 0
    %470 = vmatprep.subr.bf16.mxu0 0
    %471 = vmatpush1.bf16.msra.mxu0 0
    %472 = vmatprep.subr.bf16.mxu0 0
    %473 = vmatpush1.bf16.msra.mxu0 0
    %474 = vmatprep.mubr.bf16.mxu0 0
    %475 = vmatmul.mubr.bf16.gmra.mrb[0].mxu0 %v189
    %v476 = vpop.f32.mrb[0].mxu0
    %v477 = vadd.f32 %v88, %v476
    %v478 = vpop.f32.mrb[0].mxu0
    %v479 = vadd.f32 %v92, %v478
    %v480 = vpop.f32.mrb[0].mxu0
    %v481 = vadd.f32 %v88, %v480
    %v482 = vpop.f32.mrb[0].mxu0
    %v483 = vadd.f32 %v92, %v482
    %484 = vmatprep.mubr.bf16.mxu0 0
    %485 = vmatmul.mubr.bf16.gmra.mrb[0].mxu0 %v192
    %v486 = vpop.f32.mrb[0].mxu0
    %v487 = vadd.f32 %v88, %v486
    %v488 = vpop.f32.mrb[0].mxu0
    %v489 = vadd.f32 %v92, %v488
    %v490 = vpop.f32.mrb[0].mxu0
    %v491 = vadd.f32 %v88, %v490
    %v492 = vpop.f32.mrb[0].mxu0
    %v493 = vadd.f32 %v92, %v492
    %494 = vmatprep.mubr.bf16.mxu0 0
    %495 = vmatmul.mubr.bf16.gmra.mrb[0].mxu0 %v195
    %v496 = vpop.f32.mrb[0].mxu0
    %v497 = vadd.f32 %v88, %v496
    %v498 = vpop.f32.mrb[0].mxu0
    %v499 = vadd.f32 %v92, %v498
    %v500 = vpop.f32.mrb[0].mxu0
    %v501 = vadd.f32 %v88, %v500
    %v502 = vpop.f32.mrb[0].mxu0
    %v503 = vadd.f32 %v92, %v502
    %504 = vmatprep.mubr.bf16.mxu0 0
    %505 = vmatmul.mubr.bf16.gmra.mrb[0].mxu0 %v198
    %v506 = vpop.f32.mrb[0].mxu0
    %v507 = vadd.f32 %v88, %v506
    %v508 = vpop.f32.mrb[0].mxu0
    %v509 = vadd.f32 %v92, %v508
    %v510 = vpop.f32.mrb[0].mxu0
    %v511 = vadd.f32 %v88, %v510
    %v512 = vpop.f32.mrb[0].mxu0
    %v513 = vadd.f32 %v92, %v512
    %514 = vmatprep.mubr.bf16.mxu0 0
    %515 = vmatmul.mubr.bf16.gmra.mrb[0].mxu0 %v201
    %v516 = vpop.f32.mrb[0].mxu0
    %v517 = vadd.f32 %v88, %v516
    %v518 = vpop.f32.mrb[0].mxu0
    %v519 = vadd.f32 %v92, %v518
    %v520 = vpop.f32.mrb[0].mxu0
    %v521 = vadd.f32 %v88, %v520
    %v522 = vpop.f32.mrb[0].mxu0
    %v523 = vadd.f32 %v92, %v522
    %524 = vmatprep.mubr.bf16.mxu0 0
    %525 = vmatmul.mubr.bf16.gmra.mrb[0].mxu0 %v204
    %v526 = vpop.f32.mrb[0].mxu0
    %v527 = vadd.f32 %v88, %v526
    %v528 = vpop.f32.mrb[0].mxu0
    %v529 = vadd.f32 %v92, %v528
    %v530 = vpop.f32.mrb[0].mxu0
    %v531 = vadd.f32 %v88, %v530
    %v532 = vpop.f32.mrb[0].mxu0
    %v533 = vadd.f32 %v92, %v532
    %534 = vmatprep.mubr.bf16.mxu0 0
    %535 = vmatmul.mubr.bf16.gmra.mrb[0].mxu0 %v207
    %v536 = vpop.f32.mrb[0].mxu0
    %v537 = vadd.f32 %v88, %v536
    %v538 = vpop.f32.mrb[0].mxu0
    %v539 = vadd.f32 %v92, %v538
    %v540 = vpop.f32.mrb[0].mxu0
    %v541 = vadd.f32 %v88, %v540
    %v542 = vpop.f32.mrb[0].mxu0
    %v543 = vadd.f32 %v92, %v542
    %544 = vmatprep.mubr.bf16.mxu0 0
    %545 = vmatmul.mubr.bf16.gmra.mrb[0].mxu0 %v210
    %v546 = vpop.f32.mrb[0].mxu0
    %v547 = vadd.f32 %v88, %v546
    %v548 = vpop.f32.mrb[0].mxu0
    %v549 = vadd.f32 %v92, %v548
    %v550 = vpop.f32.mrb[0].mxu0
    %v551 = vadd.f32 %v88, %v550
    %v552 = vpop.f32.mrb[0].mxu0
    %v553 = vadd.f32 %v92, %v552
    %554 = vmatprep.mubr.bf16.mxu0 0
    %555 = vmatmul.mubr.bf16.gmra.mrb[0].mxu0 %v213
    %v556 = vpop.f32.mrb[0].mxu0
    %v557 = vadd.f32 %v88, %v556
    %v558 = vpop.f32.mrb[0].mxu0
    %v559 = vadd.f32 %v92, %v558
    %v560 = vpop.f32.mrb[0].mxu0
    %v561 = vadd.f32 %v88, %v560
    %v562 = vpop.f32.mrb[0].mxu0
    %v563 = vadd.f32 %v92, %v562
    %564 = vmatprep.mubr.bf16.mxu0 0
    %565 = vmatmul.mubr.bf16.gmra.mrb[0].mxu0 %v216
    %v566 = vpop.f32.mrb[0].mxu0
    %v567 = vadd.f32 %v88, %v566
    %v568 = vpop.f32.mrb[0].mxu0
    %v569 = vadd.f32 %v92, %v568
    %v570 = vpop.f32.mrb[0].mxu0
    %v571 = vadd.f32 %v88, %v570
    %v572 = vpop.f32.mrb[0].mxu0
    %v573 = vadd.f32 %v92, %v572
    %574 = vmatprep.mubr.bf16.mxu0 0
    %575 = vmatmul.mubr.bf16.gmra.mrb[0].mxu0 %v219
    %v576 = vpop.f32.mrb[0].mxu0
    %v577 = vadd.f32 %v88, %v576
    %v578 = vpop.f32.mrb[0].mxu0
    %v579 = vadd.f32 %v92, %v578
    %v580 = vpop.f32.mrb[0].mxu0
    %v581 = vadd.f32 %v88, %v580
    %v582 = vpop.f32.mrb[0].mxu0
    %v583 = vadd.f32 %v92, %v582
    %584 = vmatprep.mubr.bf16.mxu0 0
    %585 = vmatmul.mubr.bf16.gmra.mrb[0].mxu0 %v222
    %v586 = vpop.f32.mrb[0].mxu0
    %v587 = vadd.f32 %v88, %v586
    %v588 = vpop.f32.mrb[0].mxu0
    %v589 = vadd.f32 %v92, %v588
    %v590 = vpop.f32.mrb[0].mxu0
    %v591 = vadd.f32 %v88, %v590
    %v592 = vpop.f32.mrb[0].mxu0
    %v593 = vadd.f32 %v92, %v592
    %594 = vmatprep.mubr.bf16.mxu0 0
    %595 = vmatmul.mubr.bf16.gmra.mrb[0].mxu0 %v225
    %v596 = vpop.f32.mrb[0].mxu0
    %v597 = vadd.f32 %v88, %v596
    %v598 = vpop.f32.mrb[0].mxu0
    %v599 = vadd.f32 %v92, %v598
    %v600 = vpop.f32.mrb[0].mxu0
    %v601 = vadd.f32 %v88, %v600
    %v602 = vpop.f32.mrb[0].mxu0
    %v603 = vadd.f32 %v92, %v602
    %604 = vmatprep.mubr.bf16.mxu0 0
    %605 = vmatmul.mubr.bf16.gmra.mrb[0].mxu0 %v228
    %v606 = vpop.f32.mrb[0].mxu0
    %v607 = vadd.f32 %v88, %v606
    %v608 = vpop.f32.mrb[0].mxu0
    %v609 = vadd.f32 %v92, %v608
    %v610 = vpop.f32.mrb[0].mxu0
    %v611 = vadd.f32 %v88, %v610
    %v612 = vpop.f32.mrb[0].mxu0
    %v613 = vadd.f32 %v92, %v612
    %614 = vmatprep.mubr.bf16.mxu0 0
    %615 = vmatmul.mubr.bf16.gmra.mrb[0].mxu0 %v231
    %v616 = vpop.f32.mrb[0].mxu0
    %v617 = vadd.f32 %v88, %v616
    %v618 = vpop.f32.mrb[0].mxu0
    %v619 = vadd.f32 %v92, %v618
    %v620 = vpop.f32.mrb[0].mxu0
    %v621 = vadd.f32 %v88, %v620
    %v622 = vpop.f32.mrb[0].mxu0
    %v623 = vadd.f32 %v92, %v622
    %624 = vmatprep.mubr.bf16.mxu0 0
    %625 = vmatmul.mubr.bf16.gmra.mrb[0].mxu0 %v234
    %v626 = vpop.f32.mrb[0].mxu0
    %v627 = vadd.f32 %v88, %v626
    %v628 = vpop.f32.mrb[0].mxu0
    %v629 = vadd.f32 %v92, %v628
    %v630 = vpop.f32.mrb[0].mxu0
    %v631 = vadd.f32 %v88, %v630
    %v632 = vpop.f32.mrb[0].mxu0
    %v633 = vadd.f32 %v92, %v632
    %634 = vdwg.mxu0
    %v635 = vmax.f32 %v284, 0.0
    %v636 = vmax.f32 %v286, 0.0
    %v637 = vmax.f32 %v477, 0.0
    %v638 = vmax.f32 %v479, 0.0
    %v639 = vmax.f32 %v288, 0.0
    %v640 = vmax.f32 %v290, 0.0
    %v641 = vmax.f32 %v481, 0.0
    %v642 = vmax.f32 %v483, 0.0
    %v643 = vmax.f32 %v294, 0.0
    %v644 = vmax.f32 %v296, 0.0
    %v645 = vmax.f32 %v487, 0.0
    %v646 = vmax.f32 %v489, 0.0
    %v647 = vmax.f32 %v298, 0.0
    %v648 = vmax.f32 %v300, 0.0
    %v649 = vmax.f32 %v491, 0.0
    %v650 = vmax.f32 %v493, 0.0
    %v651 = vmax.f32 %v304, 0.0
    %v652 = vmax.f32 %v306, 0.0
    %v653 = vmax.f32 %v497, 0.0
    %v654 = vmax.f32 %v499, 0.0
    %v655 = vmax.f32 %v308, 0.0
    %v656 = vmax.f32 %v310, 0.0
    %v657 = vmax.f32 %v501, 0.0
    %v658 = vmax.f32 %v503, 0.0
    %v659 = vmax.f32 %v314, 0.0
    %v660 = vmax.f32 %v316, 0.0
    %v661 = vmax.f32 %v507, 0.0
    %v662 = vmax.f32 %v509, 0.0
    %v663 = vmax.f32 %v318, 0.0
    %v664 = vmax.f32 %v320, 0.0
    %v665 = vmax.f32 %v511, 0.0
    %v666 = vmax.f32 %v513, 0.0
    %v667 = vmax.f32 %v324, 0.0
    %v668 = vmax.f32 %v326, 0.0
    %v669 = vmax.f32 %v517, 0.0
    %v670 = vmax.f32 %v519, 0.0
    %v671 = vmax.f32 %v328, 0.0
    %v672 = vmax.f32 %v330, 0.0
    %v673 = vmax.f32 %v521, 0.0
    %v674 = vmax.f32 %v523, 0.0
    %v675 = vmax.f32 %v334, 0.0
    %v676 = vmax.f32 %v336, 0.0
    %v677 = vmax.f32 %v527, 0.0
    %v678 = vmax.f32 %v529, 0.0
    %v679 = vmax.f32 %v338, 0.0
    %v680 = vmax.f32 %v340, 0.0
    %v681 = vmax.f32 %v531, 0.0
    %v682 = vmax.f32 %v533, 0.0
    %v683 = vmax.f32 %v344, 0.0
    %v684 = vmax.f32 %v346, 0.0
    %v685 = vmax.f32 %v537, 0.0
    %v686 = vmax.f32 %v539, 0.0
    %v687 = vmax.f32 %v348, 0.0
    %v688 = vmax.f32 %v350, 0.0
    %v689 = vmax.f32 %v541, 0.0
    %v690 = vmax.f32 %v543, 0.0
    %v691 = vmax.f32 %v354, 0.0
    %v692 = vmax.f32 %v356, 0.0
    %v693 = vmax.f32 %v547, 0.0
    %v694 = vmax.f32 %v549, 0.0
    %v695 = vmax.f32 %v358, 0.0
    %v696 = vmax.f32 %v360, 0.0
    %v697 = vmax.f32 %v551, 0.0
    %v698 = vmax.f32 %v553, 0.0
    %v699 = vmax.f32 %v364, 0.0
    %v700 = vmax.f32 %v366, 0.0
    %v701 = vmax.f32 %v557, 0.0
    %v702 = vmax.f32 %v559, 0.0
    %v703 = vmax.f32 %v368, 0.0
    %v704 = vmax.f32 %v370, 0.0
    %v705 = vmax.f32 %v561, 0.0
    %v706 = vmax.f32 %v563, 0.0
    %v707 = vmax.f32 %v374, 0.0
    %v708 = vmax.f32 %v376, 0.0
    %v709 = vmax.f32 %v567, 0.0
    %v710 = vmax.f32 %v569, 0.0
    %v711 = vmax.f32 %v378, 0.0
    %v712 = vmax.f32 %v380, 0.0
    %v713 = vmax.f32 %v571, 0.0
    %v714 = vmax.f32 %v573, 0.0
    %v715 = vmax.f32 %v384, 0.0
    %v716 = vmax.f32 %v386, 0.0
    %v717 = vmax.f32 %v577, 0.0
    %v718 = vmax.f32 %v579, 0.0
    %v719 = vmax.f32 %v388, 0.0
    %v720 = vmax.f32 %v390, 0.0
    %v721 = vmax.f32 %v581, 0.0
    %v722 = vmax.f32 %v583, 0.0
    %v723 = vmax.f32 %v394, 0.0
    %v724 = vmax.f32 %v396, 0.0
    %v725 = vmax.f32 %v587, 0.0
    %v726 = vmax.f32 %v589, 0.0
    %v727 = vmax.f32 %v398, 0.0
    %v728 = vmax.f32 %v400, 0.0
    %v729 = vmax.f32 %v591, 0.0
    %v730 = vmax.f32 %v593, 0.0
    %v731 = vmax.f32 %v404, 0.0
    %v732 = vmax.f32 %v406, 0.0
    %v733 = vmax.f32 %v597, 0.0
    %v734 = vmax.f32 %v599, 0.0
    %v735 = vmax.f32 %v408, 0.0
    %v736 = vmax.f32 %v410, 0.0
    %v737 = vmax.f32 %v601, 0.0
    %v738 = vmax.f32 %v603, 0.0
    %v739 = vmax.f32 %v414, 0.0
    %v740 = vmax.f32 %v416, 0.0
    %v741 = vmax.f32 %v607, 0.0
    %v742 = vmax.f32 %v609, 0.0
    %v743 = vmax.f32 %v418, 0.0
    %v744 = vmax.f32 %v420, 0.0
    %v745 = vmax.f32 %v611, 0.0
    %v746 = vmax.f32 %v613, 0.0
    %v747 = vmax.f32 %v424, 0.0
    %v748 = vmax.f32 %v426, 0.0
    %v749 = vmax.f32 %v617, 0.0
    %v750 = vmax.f32 %v619, 0.0
    %v751 = vmax.f32 %v428, 0.0
    %v752 = vmax.f32 %v430, 0.0
    %v753 = vmax.f32 %v621, 0.0
    %v754 = vmax.f32 %v623, 0.0
    %v755 = vmax.f32 %v434, 0.0
    %v756 = vmax.f32 %v436, 0.0
    %v757 = vmax.f32 %v627, 0.0
    %v758 = vmax.f32 %v629, 0.0
    %v759 = vmax.f32 %v438, 0.0
    %v760 = vmax.f32 %v440, 0.0
    %v761 = vmax.f32 %v631, 0.0
    %v762 = vmax.f32 %v633, 0.0
    %v763 = vpack.c.bf16 %v639, %v635
    %v764 = vpack.c.bf16 %v640, %v636
    %v765 = vpack.c.bf16 %v641, %v637
    %v766 = vpack.c.bf16 %v642, %v638
    %v767 = vpack.c.bf16 %v647, %v643
    %v768 = vpack.c.bf16 %v648, %v644
    %v769 = vpack.c.bf16 %v649, %v645
    %v770 = vpack.c.bf16 %v650, %v646
    %v771 = vpack.c.bf16 %v655, %v651
    %v772 = vpack.c.bf16 %v656, %v652
    %v773 = vpack.c.bf16 %v657, %v653
    %v774 = vpack.c.bf16 %v658, %v654
    %v775 = vpack.c.bf16 %v663, %v659
    %v776 = vpack.c.bf16 %v664, %v660
    %v777 = vpack.c.bf16 %v665, %v661
    %v778 = vpack.c.bf16 %v666, %v662
    %v779 = vpack.c.bf16 %v671, %v667
    %v780 = vpack.c.bf16 %v672, %v668
    %v781 = vpack.c.bf16 %v673, %v669
    %v782 = vpack.c.bf16 %v674, %v670
    %v783 = vpack.c.bf16 %v679, %v675
    %v784 = vpack.c.bf16 %v680, %v676
    %v785 = vpack.c.bf16 %v681, %v677
    %v786 = vpack.c.bf16 %v682, %v678
    %v787 = vpack.c.bf16 %v687, %v683
    %v788 = vpack.c.bf16 %v688, %v684
    %v789 = vpack.c.bf16 %v689, %v685
    %v790 = vpack.c.bf16 %v690, %v686
    %v791 = vpack.c.bf16 %v695, %v691
    %v792 = vpack.c.bf16 %v696, %v692
    %v793 = vpack.c.bf16 %v697, %v693
    %v794 = vpack.c.bf16 %v698, %v694
    %v795 = vpack.c.bf16 %v703, %v699
    %v796 = vpack.c.bf16 %v704, %v700
    %v797 = vpack.c.bf16 %v705, %v701
    %v798 = vpack.c.bf16 %v706, %v702
    %v799 = vpack.c.bf16 %v711, %v707
    %v800 = vpack.c.bf16 %v712, %v708
    %v801 = vpack.c.bf16 %v713, %v709
    %v802 = vpack.c.bf16 %v714, %v710
    %v803 = vpack.c.bf16 %v719, %v715
    %v804 = vpack.c.bf16 %v720, %v716
    %v805 = vpack.c.bf16 %v721, %v717
    %v806 = vpack.c.bf16 %v722, %v718
    %v807 = vpack.c.bf16 %v727, %v723
    %v808 = vpack.c.bf16 %v728, %v724
    %v809 = vpack.c.bf16 %v729, %v725
    %v810 = vpack.c.bf16 %v730, %v726
    %v811 = vpack.c.bf16 %v735, %v731
    %v812 = vpack.c.bf16 %v736, %v732
    %v813 = vpack.c.bf16 %v737, %v733
    %v814 = vpack.c.bf16 %v738, %v734
    %v815 = vpack.c.bf16 %v743, %v739
    %v816 = vpack.c.bf16 %v744, %v740
    %v817 = vpack.c.bf16 %v745, %v741
    %v818 = vpack.c.bf16 %v746, %v742
    %v819 = vpack.c.bf16 %v751, %v747
    %v820 = vpack.c.bf16 %v752, %v748
    %v821 = vpack.c.bf16 %v753, %v749
    %v822 = vpack.c.bf16 %v754, %v750
    %v823 = vpack.c.bf16 %v759, %v755
    %v824 = vpack.c.bf16 %v760, %v756
    %v825 = vpack.c.bf16 %v761, %v757
    %v826 = vpack.c.bf16 %v762, %v758
    %v827 = vld [vmem:[#allocation2] sm:$0xff]
    %v828 = vld [vmem:[#allocation2 + $0x8] sm:$0xff]
    %v829 = vld [vmem:[#allocation2 + $0x10] sm:$0xff]
    %v830 = vld [vmem:[#allocation2 + $0x18] sm:$0xff]
    %v831 = vld [vmem:[#allocation2 + $0x20] sm:$0xff]
    %v832 = vld [vmem:[#allocation2 + $0x28] sm:$0xff]
    %v833 = vld [vmem:[#allocation2 + $0x30] sm:$0xff]
    %v834 = vld [vmem:[#allocation2 + $0x38] sm:$0xff]
    %v835 = vld [vmem:[#allocation2 + $0x40] sm:$0xff]
    %v836 = vld [vmem:[#allocation2 + $0x48] sm:$0xff]
    %v837 = vld [vmem:[#allocation2 + $0x50] sm:$0xff]
    %v838 = vld [vmem:[#allocation2 + $0x58] sm:$0xff]
    %v839 = vld [vmem:[#allocation2 + $0x60] sm:$0xff]
    %v840 = vld [vmem:[#allocation2 + $0x68] sm:$0xff]
    %v841 = vld [vmem:[#allocation2 + $0x70] sm:$0xff]
    %v842 = vld [vmem:[#allocation2 + $0x78] sm:$0xff]
    %v843 = vld [vmem:[#allocation2 + $0x80] sm:$0xff]
    %v844 = vld [vmem:[#allocation2 + $0x88] sm:$0xff]
    %v845 = vld [vmem:[#allocation2 + $0x90] sm:$0xff]
    %v846 = vld [vmem:[#allocation2 + $0x98] sm:$0xff]
    %v847 = vld [vmem:[#allocation2 + $0xa0] sm:$0xff]
    %v848 = vld [vmem:[#allocation2 + $0xa8] sm:$0xff]
    %v849 = vld [vmem:[#allocation2 + $0xb0] sm:$0xff]
    %v850 = vld [vmem:[#allocation2 + $0xb8] sm:$0xff]
    %v851 = vld [vmem:[#allocation2 + $0xc0] sm:$0xff]
    %v852 = vld [vmem:[#allocation2 + $0xc8] sm:$0xff]
    %v853 = vld [vmem:[#allocation2 + $0xd0] sm:$0xff]
    %v854 = vld [vmem:[#allocation2 + $0xd8] sm:$0xff]
    %v855 = vld [vmem:[#allocation2 + $0xe0] sm:$0xff]
    %v856 = vld [vmem:[#allocation2 + $0xe8] sm:$0xff]
    %v857 = vld [vmem:[#allocation2 + $0xf0] sm:$0xff]
    %v858 = vld [vmem:[#allocation2 + $0xf8] sm:$0xff]
    %v859 = vld [vmem:[#allocation2 + $0x100] sm:$0xff]
    %v860 = vld [vmem:[#allocation2 + $0x108] sm:$0xff]
    %v861 = vld [vmem:[#allocation2 + $0x110] sm:$0xff]
    %v862 = vld [vmem:[#allocation2 + $0x118] sm:$0xff]
    %v863 = vld [vmem:[#allocation2 + $0x120] sm:$0xff]
    %v864 = vld [vmem:[#allocation2 + $0x128] sm:$0xff]
    %v865 = vld [vmem:[#allocation2 + $0x130] sm:$0xff]
    %v866 = vld [vmem:[#allocation2 + $0x138] sm:$0xff]
    %v867 = vld [vmem:[#allocation2 + $0x140] sm:$0xff]
    %v868 = vld [vmem:[#allocation2 + $0x148] sm:$0xff]
    %v869 = vld [vmem:[#allocation2 + $0x150] sm:$0xff]
    %v870 = vld [vmem:[#allocation2 + $0x158] sm:$0xff]
    %v871 = vld [vmem:[#allocation2 + $0x160] sm:$0xff]
    %v872 = vld [vmem:[#allocation2 + $0x168] sm:$0xff]
    %v873 = vld [vmem:[#allocation2 + $0x170] sm:$0xff]
    %v874 = vld [vmem:[#allocation2 + $0x178] sm:$0xff]
    %v875 = vld [vmem:[#allocation2 + $0x180] sm:$0xff]
    %v876 = vld [vmem:[#allocation2 + $0x188] sm:$0xff]
    %v877 = vld [vmem:[#allocation2 + $0x190] sm:$0xff]
    %v878 = vld [vmem:[#allocation2 + $0x198] sm:$0xff]
    %v879 = vld [vmem:[#allocation2 + $0x1a0] sm:$0xff]
    %v880 = vld [vmem:[#allocation2 + $0x1a8] sm:$0xff]
    %v881 = vld [vmem:[#allocation2 + $0x1b0] sm:$0xff]
    %v882 = vld [vmem:[#allocation2 + $0x1b8] sm:$0xff]
    %v883 = vld [vmem:[#allocation2 + $0x1c0] sm:$0xff]
    %v884 = vld [vmem:[#allocation2 + $0x1c8] sm:$0xff]
    %v885 = vld [vmem:[#allocation2 + $0x1d0] sm:$0xff]
    %v886 = vld [vmem:[#allocation2 + $0x1d8] sm:$0xff]
    %v887 = vld [vmem:[#allocation2 + $0x1e0] sm:$0xff]
    %v888 = vld [vmem:[#allocation2 + $0x1e8] sm:$0xff]
    %v889 = vld [vmem:[#allocation2 + $0x1f0] sm:$0xff]
    %v890 = vld [vmem:[#allocation2 + $0x1f8] sm:$0xff]
    %v891 = vld [vmem:[%s4] sm:$0x3]
    %v893 = vlaneseq
    %v894 = vshrl.u32 %v893, 7
    %v895 = vsub.s32 0, %v894
    %v896 = vrot.slane %v891, %v895
    %v897 = vlaneseq
    %v898 = vshrl.u32 %v897, 7
    %v899 = vsub.s32 1, %v898
    %v900 = vrot.slane %v891, %v899
    %v967 = vunpack.c.l.b16 %v827
    %v968 = vunpack.c.h.b16 %v827
    %v969 = vunpack.c.l.b16 %v828
    %v970 = vunpack.c.h.b16 %v828
    %v971 = vunpack.c.l.b16 %v829
    %v972 = vunpack.c.h.b16 %v829
    %v973 = vunpack.c.l.b16 %v830
    %v974 = vunpack.c.h.b16 %v830
    %v975 = vunpack.c.l.b16 %v831
    %v976 = vunpack.c.h.b16 %v831
    %v977 = vunpack.c.l.b16 %v832
    %v978 = vunpack.c.h.b16 %v832
    %v979 = vunpack.c.l.b16 %v833
    %v980 = vunpack.c.h.b16 %v833
    %v981 = vunpack.c.l.b16 %v834
    %v982 = vunpack.c.h.b16 %v834
    %v983 = vunpack.c.l.b16 %v835
    %v984 = vunpack.c.h.b16 %v835
    %v985 = vunpack.c.l.b16 %v836
    %v986 = vunpack.c.h.b16 %v836
    %v987 = vunpack.c.l.b16 %v837
    %v988 = vunpack.c.h.b16 %v837
    %v989 = vunpack.c.l.b16 %v838
    %v990 = vunpack.c.h.b16 %v838
    %v991 = vunpack.c.l.b16 %v839
    %v992 = vunpack.c.h.b16 %v839
    %v993 = vunpack.c.l.b16 %v840
    %v994 = vunpack.c.h.b16 %v840
    %v995 = vunpack.c.l.b16 %v841
    %v996 = vunpack.c.h.b16 %v841
    %v997 = vunpack.c.l.b16 %v842
    %v998 = vunpack.c.h.b16 %v842
    %v999 = vunpack.c.l.b16 %v843
    %v1000 = vunpack.c.h.b16 %v843
    %v1001 = vunpack.c.l.b16 %v844
    %v1002 = vunpack.c.h.b16 %v844
    %v1003 = vunpack.c.l.b16 %v845
    %v1004 = vunpack.c.h.b16 %v845
    %v1005 = vunpack.c.l.b16 %v846
    %v1006 = vunpack.c.h.b16 %v846
    %v1007 = vunpack.c.l.b16 %v847
    %v1008 = vunpack.c.h.b16 %v847
    %v1009 = vunpack.c.l.b16 %v848
    %v1010 = vunpack.c.h.b16 %v848
    %v1011 = vunpack.c.l.b16 %v849
    %v1012 = vunpack.c.h.b16 %v849
    %v1013 = vunpack.c.l.b16 %v850
    %v1014 = vunpack.c.h.b16 %v850
    %v1015 = vunpack.c.l.b16 %v851
    %v1016 = vunpack.c.h.b16 %v851
    %v1017 = vunpack.c.l.b16 %v852
    %v1018 = vunpack.c.h.b16 %v852
    %v1019 = vunpack.c.l.b16 %v853
    %v1020 = vunpack.c.h.b16 %v853
    %v1021 = vunpack.c.l.b16 %v854
    %v1022 = vunpack.c.h.b16 %v854
    %v1023 = vunpack.c.l.b16 %v855
    %v1024 = vunpack.c.h.b16 %v855
    %v1025 = vunpack.c.l.b16 %v856
    %v1026 = vunpack.c.h.b16 %v856
    %v1027 = vunpack.c.l.b16 %v857
    %v1028 = vunpack.c.h.b16 %v857
    %v1029 = vunpack.c.l.b16 %v858
    %v1030 = vunpack.c.h.b16 %v858
    %v1031 = vunpack.c.l.b16 %v859
    %v1032 = vunpack.c.h.b16 %v859
    %v1033 = vunpack.c.l.b16 %v860
    %v1034 = vunpack.c.h.b16 %v860
    %v1035 = vunpack.c.l.b16 %v861
    %v1036 = vunpack.c.h.b16 %v861
    %v1037 = vunpack.c.l.b16 %v862
    %v1038 = vunpack.c.h.b16 %v862
    %v1039 = vunpack.c.l.b16 %v863
    %v1040 = vunpack.c.h.b16 %v863
    %v1041 = vunpack.c.l.b16 %v864
    %v1042 = vunpack.c.h.b16 %v864
    %v1043 = vunpack.c.l.b16 %v865
    %v1044 = vunpack.c.h.b16 %v865
    %v1045 = vunpack.c.l.b16 %v866
    %v1046 = vunpack.c.h.b16 %v866
    %v1047 = vunpack.c.l.b16 %v867
    %v1048 = vunpack.c.h.b16 %v867
    %v1049 = vunpack.c.l.b16 %v868
    %v1050 = vunpack.c.h.b16 %v868
    %v1051 = vunpack.c.l.b16 %v869
    %v1052 = vunpack.c.h.b16 %v869
    %v1053 = vunpack.c.l.b16 %v870
    %v1054 = vunpack.c.h.b16 %v870
    %v1055 = vunpack.c.l.b16 %v871
    %v1056 = vunpack.c.h.b16 %v871
    %v1057 = vunpack.c.l.b16 %v872
    %v1058 = vunpack.c.h.b16 %v872
    %v1059 = vunpack.c.l.b16 %v873
    %v1060 = vunpack.c.h.b16 %v873
    %v1061 = vunpack.c.l.b16 %v874
    %v1062 = vunpack.c.h.b16 %v874
    %v1063 = vunpack.c.l.b16 %v875
    %v1064 = vunpack.c.h.b16 %v875
    %v1065 = vunpack.c.l.b16 %v876
    %v1066 = vunpack.c.h.b16 %v876
    %v1067 = vunpack.c.l.b16 %v877
    %v1068 = vunpack.c.h.b16 %v877
    %v1069 = vunpack.c.l.b16 %v878
    %v1070 = vunpack.c.h.b16 %v878
    %v1071 = vunpack.c.l.b16 %v879
    %v1072 = vunpack.c.h.b16 %v879
    %v1073 = vunpack.c.l.b16 %v880
    %v1074 = vunpack.c.h.b16 %v880
    %v1075 = vunpack.c.l.b16 %v881
    %v1076 = vunpack.c.h.b16 %v881
    %v1077 = vunpack.c.l.b16 %v882
    %v1078 = vunpack.c.h.b16 %v882
    %v1079 = vunpack.c.l.b16 %v883
    %v1080 = vunpack.c.h.b16 %v883
    %v1081 = vunpack.c.l.b16 %v884
    %v1082 = vunpack.c.h.b16 %v884
    %v1083 = vunpack.c.l.b16 %v885
    %v1084 = vunpack.c.h.b16 %v885
    %v1085 = vunpack.c.l.b16 %v886
    %v1086 = vunpack.c.h.b16 %v886
    %v1087 = vunpack.c.l.b16 %v887
    %v1088 = vunpack.c.h.b16 %v887
    %v1089 = vunpack.c.l.b16 %v888
    %v1090 = vunpack.c.h.b16 %v888
    %v1091 = vunpack.c.l.b16 %v889
    %v1092 = vunpack.c.h.b16 %v889
    %v1093 = vunpack.c.l.b16 %v890
    %v1094 = vunpack.c.h.b16 %v890
    %v1095 = vpack.c.b16 %v969, %v967
    %v1096 = vpack.c.b16 %v970, %v968
    %v1097 = vpack.c.b16 %v973, %v971
    %v1098 = vpack.c.b16 %v974, %v972
    %v1099 = vpack.c.b16 %v977, %v975
    %v1100 = vpack.c.b16 %v978, %v976
    %v1101 = vpack.c.b16 %v981, %v979
    %v1102 = vpack.c.b16 %v982, %v980
    %v1103 = vpack.c.b16 %v985, %v983
    %v1104 = vpack.c.b16 %v986, %v984
    %v1105 = vpack.c.b16 %v989, %v987
    %v1106 = vpack.c.b16 %v990, %v988
    %v1107 = vpack.c.b16 %v993, %v991
    %v1108 = vpack.c.b16 %v994, %v992
    %v1109 = vpack.c.b16 %v997, %v995
    %v1110 = vpack.c.b16 %v998, %v996
    %v1111 = vpack.c.b16 %v1001, %v999
    %v1112 = vpack.c.b16 %v1002, %v1000
    %v1113 = vpack.c.b16 %v1005, %v1003
    %v1114 = vpack.c.b16 %v1006, %v1004
    %v1115 = vpack.c.b16 %v1009, %v1007
    %v1116 = vpack.c.b16 %v1010, %v1008
    %v1117 = vpack.c.b16 %v1013, %v1011
    %v1118 = vpack.c.b16 %v1014, %v1012
    %v1119 = vpack.c.b16 %v1017, %v1015
    %v1120 = vpack.c.b16 %v1018, %v1016
    %v1121 = vpack.c.b16 %v1021, %v1019
    %v1122 = vpack.c.b16 %v1022, %v1020
    %v1123 = vpack.c.b16 %v1025, %v1023
    %v1124 = vpack.c.b16 %v1026, %v1024
    %v1125 = vpack.c.b16 %v1029, %v1027
    %v1126 = vpack.c.b16 %v1030, %v1028
    %v1127 = vpack.c.b16 %v1033, %v1031
    %v1128 = vpack.c.b16 %v1034, %v1032
    %v1129 = vpack.c.b16 %v1037, %v1035
    %v1130 = vpack.c.b16 %v1038, %v1036
    %v1131 = vpack.c.b16 %v1041, %v1039
    %v1132 = vpack.c.b16 %v1042, %v1040
    %v1133 = vpack.c.b16 %v1045, %v1043
    %v1134 = vpack.c.b16 %v1046, %v1044
    %v1135 = vpack.c.b16 %v1049, %v1047
    %v1136 = vpack.c.b16 %v1050, %v1048
    %v1137 = vpack.c.b16 %v1053, %v1051
    %v1138 = vpack.c.b16 %v1054, %v1052
    %v1139 = vpack.c.b16 %v1057, %v1055
    %v1140 = vpack.c.b16 %v1058, %v1056
    %v1141 = vpack.c.b16 %v1061, %v1059
    %v1142 = vpack.c.b16 %v1062, %v1060
    %v1143 = vpack.c.b16 %v1065, %v1063
    %v1144 = vpack.c.b16 %v1066, %v1064
    %v1145 = vpack.c.b16 %v1069, %v1067
    %v1146 = vpack.c.b16 %v1070, %v1068
    %v1147 = vpack.c.b16 %v1073, %v1071
    %v1148 = vpack.c.b16 %v1074, %v1072
    %v1149 = vpack.c.b16 %v1077, %v1075
    %v1150 = vpack.c.b16 %v1078, %v1076
    %v1151 = vpack.c.b16 %v1081, %v1079
    %v1152 = vpack.c.b16 %v1082, %v1080
    %v1153 = vpack.c.b16 %v1085, %v1083
    %v1154 = vpack.c.b16 %v1086, %v1084
    %v1155 = vpack.c.b16 %v1089, %v1087
    %v1156 = vpack.c.b16 %v1090, %v1088
    %v1157 = vpack.c.b16 %v1093, %v1091
    %v1158 = vpack.c.b16 %v1094, %v1092
    %1223 = vmatprep.subr.bf16.mxu0 %v1096
    %1224 = vmatpush1.bf16.msra.mxu0 %v1095
    %1225 = vmatprep.subr.bf16.mxu0 %v1098
    %1226 = vmatpush1.bf16.msra.mxu0 %v1097
    %1227 = vmatprep.subr.bf16.mxu0 %v1100
    %1228 = vmatpush1.bf16.msra.mxu0 %v1099
    %1229 = vmatprep.subr.bf16.mxu0 %v1102
    %1230 = vmatpush1.bf16.msra.mxu0 %v1101
    %1231 = vmatprep.subr.bf16.mxu0 %v1104
    %1232 = vmatpush1.bf16.msra.mxu0 %v1103
    %1233 = vmatprep.subr.bf16.mxu0 %v1106
    %1234 = vmatpush1.bf16.msra.mxu0 %v1105
    %1235 = vmatprep.subr.bf16.mxu0 %v1108
    %1236 = vmatpush1.bf16.msra.mxu0 %v1107
    %1237 = vmatprep.subr.bf16.mxu0 %v1110
    %1238 = vmatpush1.bf16.msra.mxu0 %v1109
    %1239 = vmatprep.subr.bf16.mxu0 %v1112
    %1240 = vmatpush1.bf16.msra.mxu0 %v1111
    %1241 = vmatprep.subr.bf16.mxu0 %v1114
    %1242 = vmatpush1.bf16.msra.mxu0 %v1113
    %1243 = vmatprep.subr.bf16.mxu0 %v1116
    %1244 = vmatpush1.bf16.msra.mxu0 %v1115
    %1245 = vmatprep.subr.bf16.mxu0 %v1118
    %1246 = vmatpush1.bf16.msra.mxu0 %v1117
    %1247 = vmatprep.subr.bf16.mxu0 %v1120
    %1248 = vmatpush1.bf16.msra.mxu0 %v1119
    %1249 = vmatprep.subr.bf16.mxu0 %v1122
    %1250 = vmatpush1.bf16.msra.mxu0 %v1121
    %1251 = vmatprep.subr.bf16.mxu0 %v1124
    %1252 = vmatpush1.bf16.msra.mxu0 %v1123
    %1253 = vmatprep.subr.bf16.mxu0 %v1126
    %1254 = vmatpush1.bf16.msra.mxu0 %v1125
    %1255 = vmatprep.mubr.bf16.mxu0 %v764
    %1256 = vmatmul.mubr.bf16.gmra.mrb[0].mxu0 %v763
    %v1257 = vpop.f32.mrb[0].mxu0
    %v1258 = vadd.f32 %v896, %v1257
    %v1259 = vpop.f32.mrb[0].mxu0
    %v1260 = vadd.f32 %v900, %v1259
    %v1261 = vpop.f32.mrb[0].mxu0
    %v1262 = vadd.f32 %v896, %v1261
    %v1263 = vpop.f32.mrb[0].mxu0
    %v1264 = vadd.f32 %v900, %v1263
    %1265 = vmatprep.mubr.bf16.mxu0 %v768
    %1266 = vmatmul.mubr.bf16.gmra.mrb[0].mxu0 %v767
    %v1267 = vpop.f32.mrb[0].mxu0
    %v1268 = vadd.f32 %v896, %v1267
    %v1269 = vpop.f32.mrb[0].mxu0
    %v1270 = vadd.f32 %v900, %v1269
    %v1271 = vpop.f32.mrb[0].mxu0
    %v1272 = vadd.f32 %v896, %v1271
    %v1273 = vpop.f32.mrb[0].mxu0
    %v1274 = vadd.f32 %v900, %v1273
    %1275 = vmatprep.mubr.bf16.mxu0 %v772
    %1276 = vmatmul.mubr.bf16.gmra.mrb[0].mxu0 %v771
    %v1277 = vpop.f32.mrb[0].mxu0
    %v1278 = vadd.f32 %v896, %v1277
    %v1279 = vpop.f32.mrb[0].mxu0
    %v1280 = vadd.f32 %v900, %v1279
    %v1281 = vpop.f32.mrb[0].mxu0
    %v1282 = vadd.f32 %v896, %v1281
    %v1283 = vpop.f32.mrb[0].mxu0
    %v1284 = vadd.f32 %v900, %v1283
    %1285 = vmatprep.mubr.bf16.mxu0 %v776
    %1286 = vmatmul.mubr.bf16.gmra.mrb[0].mxu0 %v775
    %v1287 = vpop.f32.mrb[0].mxu0
    %v1288 = vadd.f32 %v896, %v1287
    %v1289 = vpop.f32.mrb[0].mxu0
    %v1290 = vadd.f32 %v900, %v1289
    %v1291 = vpop.f32.mrb[0].mxu0
    %v1292 = vadd.f32 %v896, %v1291
    %v1293 = vpop.f32.mrb[0].mxu0
    %v1294 = vadd.f32 %v900, %v1293
    %1295 = vmatprep.mubr.bf16.mxu0 %v780
    %1296 = vmatmul.mubr.bf16.gmra.mrb[0].mxu0 %v779
    %v1297 = vpop.f32.mrb[0].mxu0
    %v1298 = vadd.f32 %v896, %v1297
    %v1299 = vpop.f32.mrb[0].mxu0
    %v1300 = vadd.f32 %v900, %v1299
    %v1301 = vpop.f32.mrb[0].mxu0
    %v1302 = vadd.f32 %v896, %v1301
    %v1303 = vpop.f32.mrb[0].mxu0
    %v1304 = vadd.f32 %v900, %v1303
    %1305 = vmatprep.mubr.bf16.mxu0 %v784
    %1306 = vmatmul.mubr.bf16.gmra.mrb[0].mxu0 %v783
    %v1307 = vpop.f32.mrb[0].mxu0
    %v1308 = vadd.f32 %v896, %v1307
    %v1309 = vpop.f32.mrb[0].mxu0
    %v1310 = vadd.f32 %v900, %v1309
    %v1311 = vpop.f32.mrb[0].mxu0
    %v1312 = vadd.f32 %v896, %v1311
    %v1313 = vpop.f32.mrb[0].mxu0
    %v1314 = vadd.f32 %v900, %v1313
    %1315 = vmatprep.mubr.bf16.mxu0 %v788
    %1316 = vmatmul.mubr.bf16.gmra.mrb[0].mxu0 %v787
    %v1317 = vpop.f32.mrb[0].mxu0
    %v1318 = vadd.f32 %v896, %v1317
    %v1319 = vpop.f32.mrb[0].mxu0
    %v1320 = vadd.f32 %v900, %v1319
    %v1321 = vpop.f32.mrb[0].mxu0
    %v1322 = vadd.f32 %v896, %v1321
    %v1323 = vpop.f32.mrb[0].mxu0
    %v1324 = vadd.f32 %v900, %v1323
    %1325 = vmatprep.mubr.bf16.mxu0 %v792
    %1326 = vmatmul.mubr.bf16.gmra.mrb[0].mxu0 %v791
    %v1327 = vpop.f32.mrb[0].mxu0
    %v1328 = vadd.f32 %v896, %v1327
    %v1329 = vpop.f32.mrb[0].mxu0
    %v1330 = vadd.f32 %v900, %v1329
    %v1331 = vpop.f32.mrb[0].mxu0
    %v1332 = vadd.f32 %v896, %v1331
    %v1333 = vpop.f32.mrb[0].mxu0
    %v1334 = vadd.f32 %v900, %v1333
    %1335 = vmatprep.mubr.bf16.mxu0 %v796
    %1336 = vmatmul.mubr.bf16.gmra.mrb[0].mxu0 %v795
    %v1337 = vpop.f32.mrb[0].mxu0
    %v1338 = vadd.f32 %v896, %v1337
    %v1339 = vpop.f32.mrb[0].mxu0
    %v1340 = vadd.f32 %v900, %v1339
    %v1341 = vpop.f32.mrb[0].mxu0
    %v1342 = vadd.f32 %v896, %v1341
    %v1343 = vpop.f32.mrb[0].mxu0
    %v1344 = vadd.f32 %v900, %v1343
    %1345 = vmatprep.mubr.bf16.mxu0 %v800
    %1346 = vmatmul.mubr.bf16.gmra.mrb[0].mxu0 %v799
    %v1347 = vpop.f32.mrb[0].mxu0
    %v1348 = vadd.f32 %v896, %v1347
    %v1349 = vpop.f32.mrb[0].mxu0
    %v1350 = vadd.f32 %v900, %v1349
    %v1351 = vpop.f32.mrb[0].mxu0
    %v1352 = vadd.f32 %v896, %v1351
    %v1353 = vpop.f32.mrb[0].mxu0
    %v1354 = vadd.f32 %v900, %v1353
    %1355 = vmatprep.mubr.bf16.mxu0 %v804
    %1356 = vmatmul.mubr.bf16.gmra.mrb[0].mxu0 %v803
    %v1357 = vpop.f32.mrb[0].mxu0
    %v1358 = vadd.f32 %v896, %v1357
    %v1359 = vpop.f32.mrb[0].mxu0
    %v1360 = vadd.f32 %v900, %v1359
    %v1361 = vpop.f32.mrb[0].mxu0
    %v1362 = vadd.f32 %v896, %v1361
    %v1363 = vpop.f32.mrb[0].mxu0
    %v1364 = vadd.f32 %v900, %v1363
    %1365 = vmatprep.mubr.bf16.mxu0 %v808
    %1366 = vmatmul.mubr.bf16.gmra.mrb[0].mxu0 %v807
    %v1367 = vpop.f32.mrb[0].mxu0
    %v1368 = vadd.f32 %v896, %v1367
    %v1369 = vpop.f32.mrb[0].mxu0
    %v1370 = vadd.f32 %v900, %v1369
    %v1371 = vpop.f32.mrb[0].mxu0
    %v1372 = vadd.f32 %v896, %v1371
    %v1373 = vpop.f32.mrb[0].mxu0
    %v1374 = vadd.f32 %v900, %v1373
    %1375 = vmatprep.mubr.bf16.mxu0 %v812
    %1376 = vmatmul.mubr.bf16.gmra.mrb[0].mxu0 %v811
    %v1377 = vpop.f32.mrb[0].mxu0
    %v1378 = vadd.f32 %v896, %v1377
    %v1379 = vpop.f32.mrb[0].mxu0
    %v1380 = vadd.f32 %v900, %v1379
    %v1381 = vpop.f32.mrb[0].mxu0
    %v1382 = vadd.f32 %v896, %v1381
    %v1383 = vpop.f32.mrb[0].mxu0
    %v1384 = vadd.f32 %v900, %v1383
    %1385 = vmatprep.mubr.bf16.mxu0 %v816
    %1386 = vmatmul.mubr.bf16.gmra.mrb[0].mxu0 %v815
    %v1387 = vpop.f32.mrb[0].mxu0
    %v1388 = vadd.f32 %v896, %v1387
    %v1389 = vpop.f32.mrb[0].mxu0
    %v1390 = vadd.f32 %v900, %v1389
    %v1391 = vpop.f32.mrb[0].mxu0
    %v1392 = vadd.f32 %v896, %v1391
    %v1393 = vpop.f32.mrb[0].mxu0
    %v1394 = vadd.f32 %v900, %v1393
    %1395 = vmatprep.mubr.bf16.mxu0 %v820
    %1396 = vmatmul.mubr.bf16.gmra.mrb[0].mxu0 %v819
    %v1397 = vpop.f32.mrb[0].mxu0
    %v1398 = vadd.f32 %v896, %v1397
    %v1399 = vpop.f32.mrb[0].mxu0
    %v1400 = vadd.f32 %v900, %v1399
    %v1401 = vpop.f32.mrb[0].mxu0
    %v1402 = vadd.f32 %v896, %v1401
    %v1403 = vpop.f32.mrb[0].mxu0
    %v1404 = vadd.f32 %v900, %v1403
    %1405 = vmatprep.mubr.bf16.mxu0 %v824
    %1406 = vmatmul.mubr.bf16.gmra.mrb[0].mxu0 %v823
    %v1407 = vpop.f32.mrb[0].mxu0
    %v1408 = vadd.f32 %v896, %v1407
    %v1409 = vpop.f32.mrb[0].mxu0
    %v1410 = vadd.f32 %v900, %v1409
    %v1411 = vpop.f32.mrb[0].mxu0
    %v1412 = vadd.f32 %v896, %v1411
    %v1413 = vpop.f32.mrb[0].mxu0
    %v1414 = vadd.f32 %v900, %v1413
    %1415 = vdwg.mxu0
    %1416 = vmatprep.subr.bf16.mxu0 %v1128
    %1417 = vmatpush1.bf16.msra.mxu0 %v1127
    %1418 = vmatprep.subr.bf16.mxu0 %v1130
    %1419 = vmatpush1.bf16.msra.mxu0 %v1129
    %1420 = vmatprep.subr.bf16.mxu0 %v1132
    %1421 = vmatpush1.bf16.msra.mxu0 %v1131
    %1422 = vmatprep.subr.bf16.mxu0 %v1134
    %1423 = vmatpush1.bf16.msra.mxu0 %v1133
    %1424 = vmatprep.subr.bf16.mxu0 %v1136
    %1425 = vmatpush1.bf16.msra.mxu0 %v1135
    %1426 = vmatprep.subr.bf16.mxu0 %v1138
    %1427 = vmatpush1.bf16.msra.mxu0 %v1137
    %1428 = vmatprep.subr.bf16.mxu0 %v1140
    %1429 = vmatpush1.bf16.msra.mxu0 %v1139
    %1430 = vmatprep.subr.bf16.mxu0 %v1142
    %1431 = vmatpush1.bf16.msra.mxu0 %v1141
    %1432 = vmatprep.subr.bf16.mxu0 %v1144
    %1433 = vmatpush1.bf16.msra.mxu0 %v1143
    %1434 = vmatprep.subr.bf16.mxu0 %v1146
    %1435 = vmatpush1.bf16.msra.mxu0 %v1145
    %1436 = vmatprep.subr.bf16.mxu0 %v1148
    %1437 = vmatpush1.bf16.msra.mxu0 %v1147
    %1438 = vmatprep.subr.bf16.mxu0 %v1150
    %1439 = vmatpush1.bf16.msra.mxu0 %v1149
    %1440 = vmatprep.subr.bf16.mxu0 %v1152
    %1441 = vmatpush1.bf16.msra.mxu0 %v1151
    %1442 = vmatprep.subr.bf16.mxu0 %v1154
    %1443 = vmatpush1.bf16.msra.mxu0 %v1153
    %1444 = vmatprep.subr.bf16.mxu0 %v1156
    %1445 = vmatpush1.bf16.msra.mxu0 %v1155
    %1446 = vmatprep.subr.bf16.mxu0 %v1158
    %1447 = vmatpush1.bf16.msra.mxu0 %v1157
    %1448 = vmatprep.mubr.bf16.mxu0 %v766
    %1449 = vmatmul.mubr.bf16.gmra.mrb[0].mxu0 %v765
    %v1450 = vpop.f32.mrb[0].mxu0
    %v1451 = vadd.f32 %v1258, %v1450
    %v1452 = vpop.f32.mrb[0].mxu0
    %v1453 = vadd.f32 %v1260, %v1452
    %v1454 = vpop.f32.mrb[0].mxu0
    %v1455 = vadd.f32 %v1262, %v1454
    %v1456 = vpop.f32.mrb[0].mxu0
    %v1457 = vadd.f32 %v1264, %v1456
    %1458 = vmatprep.mubr.bf16.mxu0 %v770
    %1459 = vmatmul.mubr.bf16.gmra.mrb[0].mxu0 %v769
    %v1460 = vpop.f32.mrb[0].mxu0
    %v1461 = vadd.f32 %v1268, %v1460
    %v1462 = vpop.f32.mrb[0].mxu0
    %v1463 = vadd.f32 %v1270, %v1462
    %v1464 = vpop.f32.mrb[0].mxu0
    %v1465 = vadd.f32 %v1272, %v1464
    %v1466 = vpop.f32.mrb[0].mxu0
    %v1467 = vadd.f32 %v1274, %v1466
    %1468 = vmatprep.mubr.bf16.mxu0 %v774
    %1469 = vmatmul.mubr.bf16.gmra.mrb[0].mxu0 %v773
    %v1470 = vpop.f32.mrb[0].mxu0
    %v1471 = vadd.f32 %v1278, %v1470
    %v1472 = vpop.f32.mrb[0].mxu0
    %v1473 = vadd.f32 %v1280, %v1472
    %v1474 = vpop.f32.mrb[0].mxu0
    %v1475 = vadd.f32 %v1282, %v1474
    %v1476 = vpop.f32.mrb[0].mxu0
    %v1477 = vadd.f32 %v1284, %v1476
    %1478 = vmatprep.mubr.bf16.mxu0 %v778
    %1479 = vmatmul.mubr.bf16.gmra.mrb[0].mxu0 %v777
    %v1480 = vpop.f32.mrb[0].mxu0
    %v1481 = vadd.f32 %v1288, %v1480
    %v1482 = vpop.f32.mrb[0].mxu0
    %v1483 = vadd.f32 %v1290, %v1482
    %v1484 = vpop.f32.mrb[0].mxu0
    %v1485 = vadd.f32 %v1292, %v1484
    %v1486 = vpop.f32.mrb[0].mxu0
    %v1487 = vadd.f32 %v1294, %v1486
    %1488 = vmatprep.mubr.bf16.mxu0 %v782
    %1489 = vmatmul.mubr.bf16.gmra.mrb[0].mxu0 %v781
    %v1490 = vpop.f32.mrb[0].mxu0
    %v1491 = vadd.f32 %v1298, %v1490
    %v1492 = vpop.f32.mrb[0].mxu0
    %v1493 = vadd.f32 %v1300, %v1492
    %v1494 = vpop.f32.mrb[0].mxu0
    %v1495 = vadd.f32 %v1302, %v1494
    %v1496 = vpop.f32.mrb[0].mxu0
    %v1497 = vadd.f32 %v1304, %v1496
    %1498 = vmatprep.mubr.bf16.mxu0 %v786
    %1499 = vmatmul.mubr.bf16.gmra.mrb[0].mxu0 %v785
    %v1500 = vpop.f32.mrb[0].mxu0
    %v1501 = vadd.f32 %v1308, %v1500
    %v1502 = vpop.f32.mrb[0].mxu0
    %v1503 = vadd.f32 %v1310, %v1502
    %v1504 = vpop.f32.mrb[0].mxu0
    %v1505 = vadd.f32 %v1312, %v1504
    %v1506 = vpop.f32.mrb[0].mxu0
    %v1507 = vadd.f32 %v1314, %v1506
    %1508 = vmatprep.mubr.bf16.mxu0 %v790
    %1509 = vmatmul.mubr.bf16.gmra.mrb[0].mxu0 %v789
    %v1510 = vpop.f32.mrb[0].mxu0
    %v1511 = vadd.f32 %v1318, %v1510
    %v1512 = vpop.f32.mrb[0].mxu0
    %v1513 = vadd.f32 %v1320, %v1512
    %v1514 = vpop.f32.mrb[0].mxu0
    %v1515 = vadd.f32 %v1322, %v1514
    %v1516 = vpop.f32.mrb[0].mxu0
    %v1517 = vadd.f32 %v1324, %v1516
    %1518 = vmatprep.mubr.bf16.mxu0 %v794
    %1519 = vmatmul.mubr.bf16.gmra.mrb[0].mxu0 %v793
    %v1520 = vpop.f32.mrb[0].mxu0
    %v1521 = vadd.f32 %v1328, %v1520
    %v1522 = vpop.f32.mrb[0].mxu0
    %v1523 = vadd.f32 %v1330, %v1522
    %v1524 = vpop.f32.mrb[0].mxu0
    %v1525 = vadd.f32 %v1332, %v1524
    %v1526 = vpop.f32.mrb[0].mxu0
    %v1527 = vadd.f32 %v1334, %v1526
    %1528 = vmatprep.mubr.bf16.mxu0 %v798
    %1529 = vmatmul.mubr.bf16.gmra.mrb[0].mxu0 %v797
    %v1530 = vpop.f32.mrb[0].mxu0
    %v1531 = vadd.f32 %v1338, %v1530
    %v1532 = vpop.f32.mrb[0].mxu0
    %v1533 = vadd.f32 %v1340, %v1532
    %v1534 = vpop.f32.mrb[0].mxu0
    %v1535 = vadd.f32 %v1342, %v1534
    %v1536 = vpop.f32.mrb[0].mxu0
    %v1537 = vadd.f32 %v1344, %v1536
    %1538 = vmatprep.mubr.bf16.mxu0 %v802
    %1539 = vmatmul.mubr.bf16.gmra.mrb[0].mxu0 %v801
    %v1540 = vpop.f32.mrb[0].mxu0
    %v1541 = vadd.f32 %v1348, %v1540
    %v1542 = vpop.f32.mrb[0].mxu0
    %v1543 = vadd.f32 %v1350, %v1542
    %v1544 = vpop.f32.mrb[0].mxu0
    %v1545 = vadd.f32 %v1352, %v1544
    %v1546 = vpop.f32.mrb[0].mxu0
    %v1547 = vadd.f32 %v1354, %v1546
    %1548 = vmatprep.mubr.bf16.mxu0 %v806
    %1549 = vmatmul.mubr.bf16.gmra.mrb[0].mxu0 %v805
    %v1550 = vpop.f32.mrb[0].mxu0
    %v1551 = vadd.f32 %v1358, %v1550
    %v1552 = vpop.f32.mrb[0].mxu0
    %v1553 = vadd.f32 %v1360, %v1552
    %v1554 = vpop.f32.mrb[0].mxu0
    %v1555 = vadd.f32 %v1362, %v1554
    %v1556 = vpop.f32.mrb[0].mxu0
    %v1557 = vadd.f32 %v1364, %v1556
    %1558 = vmatprep.mubr.bf16.mxu0 %v810
    %1559 = vmatmul.mubr.bf16.gmra.mrb[0].mxu0 %v809
    %v1560 = vpop.f32.mrb[0].mxu0
    %v1561 = vadd.f32 %v1368, %v1560
    %v1562 = vpop.f32.mrb[0].mxu0
    %v1563 = vadd.f32 %v1370, %v1562
    %v1564 = vpop.f32.mrb[0].mxu0
    %v1565 = vadd.f32 %v1372, %v1564
    %v1566 = vpop.f32.mrb[0].mxu0
    %v1567 = vadd.f32 %v1374, %v1566
    %1568 = vmatprep.mubr.bf16.mxu0 %v814
    %1569 = vmatmul.mubr.bf16.gmra.mrb[0].mxu0 %v813
    %v1570 = vpop.f32.mrb[0].mxu0
    %v1571 = vadd.f32 %v1378, %v1570
    %v1572 = vpop.f32.mrb[0].mxu0
    %v1573 = vadd.f32 %v1380, %v1572
    %v1574 = vpop.f32.mrb[0].mxu0
    %v1575 = vadd.f32 %v1382, %v1574
    %v1576 = vpop.f32.mrb[0].mxu0
    %v1577 = vadd.f32 %v1384, %v1576
    %1578 = vmatprep.mubr.bf16.mxu0 %v818
    %1579 = vmatmul.mubr.bf16.gmra.mrb[0].mxu0 %v817
    %v1580 = vpop.f32.mrb[0].mxu0
    %v1581 = vadd.f32 %v1388, %v1580
    %v1582 = vpop.f32.mrb[0].mxu0
    %v1583 = vadd.f32 %v1390, %v1582
    %v1584 = vpop.f32.mrb[0].mxu0
    %v1585 = vadd.f32 %v1392, %v1584
    %v1586 = vpop.f32.mrb[0].mxu0
    %v1587 = vadd.f32 %v1394, %v1586
    %1588 = vmatprep.mubr.bf16.mxu0 %v822
    %1589 = vmatmul.mubr.bf16.gmra.mrb[0].mxu0 %v821
    %v1590 = vpop.f32.mrb[0].mxu0
    %v1591 = vadd.f32 %v1398, %v1590
    %v1592 = vpop.f32.mrb[0].mxu0
    %v1593 = vadd.f32 %v1400, %v1592
    %v1594 = vpop.f32.mrb[0].mxu0
    %v1595 = vadd.f32 %v1402, %v1594
    %v1596 = vpop.f32.mrb[0].mxu0
    %v1597 = vadd.f32 %v1404, %v1596
    %1598 = vmatprep.mubr.bf16.mxu0 %v826
    %1599 = vmatmul.mubr.bf16.gmra.mrb[0].mxu0 %v825
    %v1600 = vpop.f32.mrb[0].mxu0
    %v1601 = vadd.f32 %v1408, %v1600
    %v1602 = vpop.f32.mrb[0].mxu0
    %v1603 = vadd.f32 %v1410, %v1602
    %v1604 = vpop.f32.mrb[0].mxu0
    %v1605 = vadd.f32 %v1412, %v1604
    %v1606 = vpop.f32.mrb[0].mxu0
    %v1607 = vadd.f32 %v1414, %v1606
    %1608 = vdwg.mxu0
    %v1609 = vmax.f32 %v1451, 0.0
    %v1610 = vmax.f32 %v1453, 0.0
    %v1611 = vmax.f32 %v1455, 0.0
    %v1612 = vmax.f32 %v1457, 0.0
    %v1613 = vmax.f32 %v1461, 0.0
    %v1614 = vmax.f32 %v1463, 0.0
    %v1615 = vmax.f32 %v1465, 0.0
    %v1616 = vmax.f32 %v1467, 0.0
    %v1617 = vmax.f32 %v1471, 0.0
    %v1618 = vmax.f32 %v1473, 0.0
    %v1619 = vmax.f32 %v1475, 0.0
    %v1620 = vmax.f32 %v1477, 0.0
    %v1621 = vmax.f32 %v1481, 0.0
    %v1622 = vmax.f32 %v1483, 0.0
    %v1623 = vmax.f32 %v1485, 0.0
    %v1624 = vmax.f32 %v1487, 0.0
    %v1625 = vmax.f32 %v1491, 0.0
    %v1626 = vmax.f32 %v1493, 0.0
    %v1627 = vmax.f32 %v1495, 0.0
    %v1628 = vmax.f32 %v1497, 0.0
    %v1629 = vmax.f32 %v1501, 0.0
    %v1630 = vmax.f32 %v1503, 0.0
    %v1631 = vmax.f32 %v1505, 0.0
    %v1632 = vmax.f32 %v1507, 0.0
    %v1633 = vmax.f32 %v1511, 0.0
    %v1634 = vmax.f32 %v1513, 0.0
    %v1635 = vmax.f32 %v1515, 0.0
    %v1636 = vmax.f32 %v1517, 0.0
    %v1637 = vmax.f32 %v1521, 0.0
    %v1638 = vmax.f32 %v1523, 0.0
    %v1639 = vmax.f32 %v1525, 0.0
    %v1640 = vmax.f32 %v1527, 0.0
    %v1641 = vmax.f32 %v1531, 0.0
    %v1642 = vmax.f32 %v1533, 0.0
    %v1643 = vmax.f32 %v1535, 0.0
    %v1644 = vmax.f32 %v1537, 0.0
    %v1645 = vmax.f32 %v1541, 0.0
    %v1646 = vmax.f32 %v1543, 0.0
    %v1647 = vmax.f32 %v1545, 0.0
    %v1648 = vmax.f32 %v1547, 0.0
    %v1649 = vmax.f32 %v1551, 0.0
    %v1650 = vmax.f32 %v1553, 0.0
    %v1651 = vmax.f32 %v1555, 0.0
    %v1652 = vmax.f32 %v1557, 0.0
    %v1653 = vmax.f32 %v1561, 0.0
    %v1654 = vmax.f32 %v1563, 0.0
    %v1655 = vmax.f32 %v1565, 0.0
    %v1656 = vmax.f32 %v1567, 0.0
    %v1657 = vmax.f32 %v1571, 0.0
    %v1658 = vmax.f32 %v1573, 0.0
    %v1659 = vmax.f32 %v1575, 0.0
    %v1660 = vmax.f32 %v1577, 0.0
    %v1661 = vmax.f32 %v1581, 0.0
    %v1662 = vmax.f32 %v1583, 0.0
    %v1663 = vmax.f32 %v1585, 0.0
    %v1664 = vmax.f32 %v1587, 0.0
    %v1665 = vmax.f32 %v1591, 0.0
    %v1666 = vmax.f32 %v1593, 0.0
    %v1667 = vmax.f32 %v1595, 0.0
    %v1668 = vmax.f32 %v1597, 0.0
    %v1669 = vmax.f32 %v1601, 0.0
    %v1670 = vmax.f32 %v1603, 0.0
    %v1671 = vmax.f32 %v1605, 0.0
    %v1672 = vmax.f32 %v1607, 0.0
    %v1673 = vpack.c.bf16 %v1611, %v1609
    %v1674 = vpack.c.bf16 %v1612, %v1610
    %v1675 = vpack.c.bf16 %v1615, %v1613
    %v1676 = vpack.c.bf16 %v1616, %v1614
    %v1677 = vpack.c.bf16 %v1619, %v1617
    %v1678 = vpack.c.bf16 %v1620, %v1618
    %v1679 = vpack.c.bf16 %v1623, %v1621
    %v1680 = vpack.c.bf16 %v1624, %v1622
    %v1681 = vpack.c.bf16 %v1627, %v1625
    %v1682 = vpack.c.bf16 %v1628, %v1626
    %v1683 = vpack.c.bf16 %v1631, %v1629
    %v1684 = vpack.c.bf16 %v1632, %v1630
    %v1685 = vpack.c.bf16 %v1635, %v1633
    %v1686 = vpack.c.bf16 %v1636, %v1634
    %v1687 = vpack.c.bf16 %v1639, %v1637
    %v1688 = vpack.c.bf16 %v1640, %v1638
    %v1689 = vpack.c.bf16 %v1643, %v1641
    %v1690 = vpack.c.bf16 %v1644, %v1642
    %v1691 = vpack.c.bf16 %v1647, %v1645
    %v1692 = vpack.c.bf16 %v1648, %v1646
    %v1693 = vpack.c.bf16 %v1651, %v1649
    %v1694 = vpack.c.bf16 %v1652, %v1650
    %v1695 = vpack.c.bf16 %v1655, %v1653
    %v1696 = vpack.c.bf16 %v1656, %v1654
    %v1697 = vpack.c.bf16 %v1659, %v1657
    %v1698 = vpack.c.bf16 %v1660, %v1658
    %v1699 = vpack.c.bf16 %v1663, %v1661
    %v1700 = vpack.c.bf16 %v1664, %v1662
    %v1701 = vpack.c.bf16 %v1667, %v1665
    %v1702 = vpack.c.bf16 %v1668, %v1666
    %v1703 = vpack.c.bf16 %v1671, %v1669
    %v1704 = vpack.c.bf16 %v1672, %v1670
    %v1705 = vld [vmem:[%s5] sm:$0xf]
    %v1706 = vld [vmem:[%s5 + $0x4] sm:$0xf]
    %v1707 = vld [vmem:[%s5 + $0x8] sm:$0xf]
    %v1708 = vld [vmem:[%s5 + $0xc] sm:$0xf]
    %v1709 = vld [vmem:[%s5 + $0x10] sm:$0xf]
    %v1710 = vld [vmem:[%s5 + $0x14] sm:$0xf]
    %v1711 = vld [vmem:[%s5 + $0x18] sm:$0xf]
    %v1712 = vld [vmem:[%s5 + $0x1c] sm:$0xf]
    %v1713 = vld [vmem:[%s5 + $0x20] sm:$0xf]
    %v1714 = vld [vmem:[%s5 + $0x24] sm:$0xf]
    %v1715 = vld [vmem:[%s5 + $0x28] sm:$0xf]
    %v1716 = vld [vmem:[%s5 + $0x2c] sm:$0xf]
    %v1717 = vld [vmem:[%s5 + $0x30] sm:$0xf]
    %v1718 = vld [vmem:[%s5 + $0x34] sm:$0xf]
    %v1719 = vld [vmem:[%s5 + $0x38] sm:$0xf]
    %v1720 = vld [vmem:[%s5 + $0x3c] sm:$0xf]
    %v1721 = vld [vmem:[%s5 + $0x40] sm:$0xf]
    %v1722 = vld [vmem:[%s5 + $0x44] sm:$0xf]
    %v1723 = vld [vmem:[%s5 + $0x48] sm:$0xf]
    %v1724 = vld [vmem:[%s5 + $0x4c] sm:$0xf]
    %v1725 = vld [vmem:[%s5 + $0x50] sm:$0xf]
    %v1726 = vld [vmem:[%s5 + $0x54] sm:$0xf]
    %v1727 = vld [vmem:[%s5 + $0x58] sm:$0xf]
    %v1728 = vld [vmem:[%s5 + $0x5c] sm:$0xf]
    %v1729 = vld [vmem:[%s5 + $0x60] sm:$0xf]
    %v1730 = vld [vmem:[%s5 + $0x64] sm:$0xf]
    %v1731 = vld [vmem:[%s5 + $0x68] sm:$0xf]
    %v1732 = vld [vmem:[%s5 + $0x6c] sm:$0xf]
    %v1733 = vld [vmem:[%s5 + $0x70] sm:$0xf]
    %v1734 = vld [vmem:[%s5 + $0x74] sm:$0xf]
    %v1735 = vld [vmem:[%s5 + $0x78] sm:$0xf]
    %v1736 = vld [vmem:[%s5 + $0x7c] sm:$0xf]
    %v1737 = vld [vmem:[%s6] sm:$0x1]
    %v1739 = vlaneseq
    %v1740 = vshrl.u32 %v1739, 7
    %v1741 = vsub.s32 0, %v1740
    %v1742 = vrot.slane %v1737, %v1741
    %v1776 = vunpack.c.l.b16 %v1705
    %v1777 = vunpack.c.l.b16 %v1706
    %v1778 = vunpack.c.l.b16 %v1707
    %v1779 = vunpack.c.l.b16 %v1708
    %v1780 = vunpack.c.l.b16 %v1709
    %v1781 = vunpack.c.l.b16 %v1710
    %v1782 = vunpack.c.l.b16 %v1711
    %v1783 = vunpack.c.l.b16 %v1712
    %v1784 = vunpack.c.l.b16 %v1713
    %v1785 = vunpack.c.l.b16 %v1714
    %v1786 = vunpack.c.l.b16 %v1715
    %v1787 = vunpack.c.l.b16 %v1716
    %v1788 = vunpack.c.l.b16 %v1717
    %v1789 = vunpack.c.l.b16 %v1718
    %v1790 = vunpack.c.l.b16 %v1719
    %v1791 = vunpack.c.l.b16 %v1720
    %v1792 = vunpack.c.l.b16 %v1721
    %v1793 = vunpack.c.l.b16 %v1722
    %v1794 = vunpack.c.l.b16 %v1723
    %v1795 = vunpack.c.l.b16 %v1724
    %v1796 = vunpack.c.l.b16 %v1725
    %v1797 = vunpack.c.l.b16 %v1726
    %v1798 = vunpack.c.l.b16 %v1727
    %v1799 = vunpack.c.l.b16 %v1728
    %v1800 = vunpack.c.l.b16 %v1729
    %v1801 = vunpack.c.l.b16 %v1730
    %v1802 = vunpack.c.l.b16 %v1731
    %v1803 = vunpack.c.l.b16 %v1732
    %v1804 = vunpack.c.l.b16 %v1733
    %v1805 = vunpack.c.l.b16 %v1734
    %v1806 = vunpack.c.l.b16 %v1735
    %v1807 = vunpack.c.l.b16 %v1736
    %v1808 = vpack.c.b16 %v1777, %v1776
    %v1809 = vpack.c.b16 %v1779, %v1778
    %v1810 = vpack.c.b16 %v1781, %v1780
    %v1811 = vpack.c.b16 %v1783, %v1782
    %v1812 = vpack.c.b16 %v1785, %v1784
    %v1813 = vpack.c.b16 %v1787, %v1786
    %v1814 = vpack.c.b16 %v1789, %v1788
    %v1815 = vpack.c.b16 %v1791, %v1790
    %v1816 = vpack.c.b16 %v1793, %v1792
    %v1817 = vpack.c.b16 %v1795, %v1794
    %v1818 = vpack.c.b16 %v1797, %v1796
    %v1819 = vpack.c.b16 %v1799, %v1798
    %v1820 = vpack.c.b16 %v1801, %v1800
    %v1821 = vpack.c.b16 %v1803, %v1802
    %v1822 = vpack.c.b16 %v1805, %v1804
    %v1823 = vpack.c.b16 %v1807, %v1806
    %1840 = vmatprep.subr.bf16.mxu0 0
    %1841 = vmatpush1.bf16.msra.mxu0 %v1808
    %1842 = vmatprep.subr.bf16.mxu0 0
    %1843 = vmatpush1.bf16.msra.mxu0 %v1809
    %1844 = vmatprep.subr.bf16.mxu0 0
    %1845 = vmatpush1.bf16.msra.mxu0 %v1810
    %1846 = vmatprep.subr.bf16.mxu0 0
    %1847 = vmatpush1.bf16.msra.mxu0 %v1811
    %1848 = vmatprep.subr.bf16.mxu0 0
    %1849 = vmatpush1.bf16.msra.mxu0 %v1812
    %1850 = vmatprep.subr.bf16.mxu0 0
    %1851 = vmatpush1.bf16.msra.mxu0 %v1813
    %1852 = vmatprep.subr.bf16.mxu0 0
    %1853 = vmatpush1.bf16.msra.mxu0 %v1814
    %1854 = vmatprep.subr.bf16.mxu0 0
    %1855 = vmatpush1.bf16.msra.mxu0 %v1815
    %1856 = vmatprep.subr.bf16.mxu0 0
    %1857 = vmatpush1.bf16.msra.mxu0 %v1816
    %1858 = vmatprep.subr.bf16.mxu0 0
    %1859 = vmatpush1.bf16.msra.mxu0 %v1817
    %1860 = vmatprep.subr.bf16.mxu0 0
    %1861 = vmatpush1.bf16.msra.mxu0 %v1818
    %1862 = vmatprep.subr.bf16.mxu0 0
    %1863 = vmatpush1.bf16.msra.mxu0 %v1819
    %1864 = vmatprep.subr.bf16.mxu0 0
    %1865 = vmatpush1.bf16.msra.mxu0 %v1820
    %1866 = vmatprep.subr.bf16.mxu0 0
    %1867 = vmatpush1.bf16.msra.mxu0 %v1821
    %1868 = vmatprep.subr.bf16.mxu0 0
    %1869 = vmatpush1.bf16.msra.mxu0 %v1822
    %1870 = vmatprep.subr.bf16.mxu0 0
    %1871 = vmatpush1.bf16.msra.mxu0 %v1823
    %1872 = vmatprep.mubr.bf16.mxu0 %v1674
    %1873 = vmatmul.mubr.bf16.gmra.mrb[0].mxu0 %v1673
    %v1874 = vpop.f32.mrb[0].mxu0
    %v1875 = vadd.f32 %v1742, %v1874
    %v1876 = vpop.f32.mrb[0].mxu0
    %v1877 = vpop.f32.mrb[0].mxu0
    %v1878 = vadd.f32 %v1742, %v1877
    %v1879 = vpop.f32.mrb[0].mxu0
    %1880 = vmatprep.mubr.bf16.mxu0 %v1676
    %1881 = vmatmul.mubr.bf16.gmra.mrb[0].mxu0 %v1675
    %v1882 = vpop.f32.mrb[0].mxu0
    %v1883 = vadd.f32 %v1742, %v1882
    %v1884 = vpop.f32.mrb[0].mxu0
    %v1885 = vpop.f32.mrb[0].mxu0
    %v1886 = vadd.f32 %v1742, %v1885
    %v1887 = vpop.f32.mrb[0].mxu0
    %1888 = vmatprep.mubr.bf16.mxu0 %v1678
    %1889 = vmatmul.mubr.bf16.gmra.mrb[0].mxu0 %v1677
    %v1890 = vpop.f32.mrb[0].mxu0
    %v1891 = vadd.f32 %v1742, %v1890
    %v1892 = vpop.f32.mrb[0].mxu0
    %v1893 = vpop.f32.mrb[0].mxu0
    %v1894 = vadd.f32 %v1742, %v1893
    %v1895 = vpop.f32.mrb[0].mxu0
    %1896 = vmatprep.mubr.bf16.mxu0 %v1680
    %1897 = vmatmul.mubr.bf16.gmra.mrb[0].mxu0 %v1679
    %v1898 = vpop.f32.mrb[0].mxu0
    %v1899 = vadd.f32 %v1742, %v1898
    %v1900 = vpop.f32.mrb[0].mxu0
    %v1901 = vpop.f32.mrb[0].mxu0
    %v1902 = vadd.f32 %v1742, %v1901
    %v1903 = vpop.f32.mrb[0].mxu0
    %1904 = vmatprep.mubr.bf16.mxu0 %v1682
    %1905 = vmatmul.mubr.bf16.gmra.mrb[0].mxu0 %v1681
    %v1906 = vpop.f32.mrb[0].mxu0
    %v1907 = vadd.f32 %v1742, %v1906
    %v1908 = vpop.f32.mrb[0].mxu0
    %v1909 = vpop.f32.mrb[0].mxu0
    %v1910 = vadd.f32 %v1742, %v1909
    %v1911 = vpop.f32.mrb[0].mxu0
    %1912 = vmatprep.mubr.bf16.mxu0 %v1684
    %1913 = vmatmul.mubr.bf16.gmra.mrb[0].mxu0 %v1683
    %v1914 = vpop.f32.mrb[0].mxu0
    %v1915 = vadd.f32 %v1742, %v1914
    %v1916 = vpop.f32.mrb[0].mxu0
    %v1917 = vpop.f32.mrb[0].mxu0
    %v1918 = vadd.f32 %v1742, %v1917
    %v1919 = vpop.f32.mrb[0].mxu0
    %1920 = vmatprep.mubr.bf16.mxu0 %v1686
    %1921 = vmatmul.mubr.bf16.gmra.mrb[0].mxu0 %v1685
    %v1922 = vpop.f32.mrb[0].mxu0
    %v1923 = vadd.f32 %v1742, %v1922
    %v1924 = vpop.f32.mrb[0].mxu0
    %v1925 = vpop.f32.mrb[0].mxu0
    %v1926 = vadd.f32 %v1742, %v1925
    %v1927 = vpop.f32.mrb[0].mxu0
    %1928 = vmatprep.mubr.bf16.mxu0 %v1688
    %1929 = vmatmul.mubr.bf16.gmra.mrb[0].mxu0 %v1687
    %v1930 = vpop.f32.mrb[0].mxu0
    %v1931 = vadd.f32 %v1742, %v1930
    %v1932 = vpop.f32.mrb[0].mxu0
    %v1933 = vpop.f32.mrb[0].mxu0
    %v1934 = vadd.f32 %v1742, %v1933
    %v1935 = vpop.f32.mrb[0].mxu0
    %1936 = vmatprep.mubr.bf16.mxu0 %v1690
    %1937 = vmatmul.mubr.bf16.gmra.mrb[0].mxu0 %v1689
    %v1938 = vpop.f32.mrb[0].mxu0
    %v1939 = vadd.f32 %v1742, %v1938
    %v1940 = vpop.f32.mrb[0].mxu0
    %v1941 = vpop.f32.mrb[0].mxu0
    %v1942 = vadd.f32 %v1742, %v1941
    %v1943 = vpop.f32.mrb[0].mxu0
    %1944 = vmatprep.mubr.bf16.mxu0 %v1692
    %1945 = vmatmul.mubr.bf16.gmra.mrb[0].mxu0 %v1691
    %v1946 = vpop.f32.mrb[0].mxu0
    %v1947 = vadd.f32 %v1742, %v1946
    %v1948 = vpop.f32.mrb[0].mxu0
    %v1949 = vpop.f32.mrb[0].mxu0
    %v1950 = vadd.f32 %v1742, %v1949
    %v1951 = vpop.f32.mrb[0].mxu0
    %1952 = vmatprep.mubr.bf16.mxu0 %v1694
    %1953 = vmatmul.mubr.bf16.gmra.mrb[0].mxu0 %v1693
    %v1954 = vpop.f32.mrb[0].mxu0
    %v1955 = vadd.f32 %v1742, %v1954
    %v1956 = vpop.f32.mrb[0].mxu0
    %v1957 = vpop.f32.mrb[0].mxu0
    %v1958 = vadd.f32 %v1742, %v1957
    %v1959 = vpop.f32.mrb[0].mxu0
    %1960 = vmatprep.mubr.bf16.mxu0 %v1696
    %1961 = vmatmul.mubr.bf16.gmra.mrb[0].mxu0 %v1695
    %v1962 = vpop.f32.mrb[0].mxu0
    %v1963 = vadd.f32 %v1742, %v1962
    %v1964 = vpop.f32.mrb[0].mxu0
    %v1965 = vpop.f32.mrb[0].mxu0
    %v1966 = vadd.f32 %v1742, %v1965
    %v1967 = vpop.f32.mrb[0].mxu0
    %1968 = vmatprep.mubr.bf16.mxu0 %v1698
    %1969 = vmatmul.mubr.bf16.gmra.mrb[0].mxu0 %v1697
    %v1970 = vpop.f32.mrb[0].mxu0
    %v1971 = vadd.f32 %v1742, %v1970
    %v1972 = vpop.f32.mrb[0].mxu0
    %v1973 = vpop.f32.mrb[0].mxu0
    %v1974 = vadd.f32 %v1742, %v1973
    %v1975 = vpop.f32.mrb[0].mxu0
    %1976 = vmatprep.mubr.bf16.mxu0 %v1700
    %1977 = vmatmul.mubr.bf16.gmra.mrb[0].mxu0 %v1699
    %v1978 = vpop.f32.mrb[0].mxu0
    %v1979 = vadd.f32 %v1742, %v1978
    %v1980 = vpop.f32.mrb[0].mxu0
    %v1981 = vpop.f32.mrb[0].mxu0
    %v1982 = vadd.f32 %v1742, %v1981
    %v1983 = vpop.f32.mrb[0].mxu0
    %1984 = vmatprep.mubr.bf16.mxu0 %v1702
    %1985 = vmatmul.mubr.bf16.gmra.mrb[0].mxu0 %v1701
    %v1986 = vpop.f32.mrb[0].mxu0
    %v1987 = vadd.f32 %v1742, %v1986
    %v1988 = vpop.f32.mrb[0].mxu0
    %v1989 = vpop.f32.mrb[0].mxu0
    %v1990 = vadd.f32 %v1742, %v1989
    %v1991 = vpop.f32.mrb[0].mxu0
    %1992 = vmatprep.mubr.bf16.mxu0 %v1704
    %1993 = vmatmul.mubr.bf16.gmra.mrb[0].mxu0 %v1703
    %v1994 = vpop.f32.mrb[0].mxu0
    %v1995 = vadd.f32 %v1742, %v1994
    %v1996 = vpop.f32.mrb[0].mxu0
    %v1997 = vpop.f32.mrb[0].mxu0
    %v1998 = vadd.f32 %v1742, %v1997
    %v1999 = vpop.f32.mrb[0].mxu0
    %2000 = vdwg.mxu0
    %v2001 = vpack.c.bf16 %v1878, %v1875
    %v2002 = vpack.c.bf16 %v1886, %v1883
    %v2003 = vpack.c.bf16 %v1894, %v1891
    %v2004 = vpack.c.bf16 %v1902, %v1899
    %v2005 = vpack.c.bf16 %v1910, %v1907
    %v2006 = vpack.c.bf16 %v1918, %v1915
    %v2007 = vpack.c.bf16 %v1926, %v1923
    %v2008 = vpack.c.bf16 %v1934, %v1931
    %v2009 = vpack.c.bf16 %v1942, %v1939
    %v2010 = vpack.c.bf16 %v1950, %v1947
    %v2011 = vpack.c.bf16 %v1958, %v1955
    %v2012 = vpack.c.bf16 %v1966, %v1963
    %v2013 = vpack.c.bf16 %v1974, %v1971
    %v2014 = vpack.c.bf16 %v1982, %v1979
    %v2015 = vpack.c.bf16 %v1990, %v1987
    %v2016 = vpack.c.bf16 %v1998, %v1995
    %v2033 = vunpack.c.l.b16 %v2001
    %v2034 = vunpack.c.h.b16 %v2001
    %v2035 = vunpack.c.l.b16 %v2002
    %v2036 = vunpack.c.h.b16 %v2002
    %v2037 = vunpack.c.l.b16 %v2003
    %v2038 = vunpack.c.h.b16 %v2003
    %v2039 = vunpack.c.l.b16 %v2004
    %v2040 = vunpack.c.h.b16 %v2004
    %v2041 = vunpack.c.l.b16 %v2005
    %v2042 = vunpack.c.h.b16 %v2005
    %v2043 = vunpack.c.l.b16 %v2006
    %v2044 = vunpack.c.h.b16 %v2006
    %v2045 = vunpack.c.l.b16 %v2007
    %v2046 = vunpack.c.h.b16 %v2007
    %v2047 = vunpack.c.l.b16 %v2008
    %v2048 = vunpack.c.h.b16 %v2008
    %v2049 = vunpack.c.l.b16 %v2009
    %v2050 = vunpack.c.h.b16 %v2009
    %v2051 = vunpack.c.l.b16 %v2010
    %v2052 = vunpack.c.h.b16 %v2010
    %v2053 = vunpack.c.l.b16 %v2011
    %v2054 = vunpack.c.h.b16 %v2011
    %v2055 = vunpack.c.l.b16 %v2012
    %v2056 = vunpack.c.h.b16 %v2012
    %v2057 = vunpack.c.l.b16 %v2013
    %v2058 = vunpack.c.h.b16 %v2013
    %v2059 = vunpack.c.l.b16 %v2014
    %v2060 = vunpack.c.h.b16 %v2014
    %v2061 = vunpack.c.l.b16 %v2015
    %v2062 = vunpack.c.h.b16 %v2015
    %v2063 = vunpack.c.l.b16 %v2016
    %v2064 = vunpack.c.h.b16 %v2016
    %v2065 = vpack.c.b16 %v2033, %v2033
    %v2066 = vpack.c.b16 %v2034, %v2034
    %v2067 = vpack.c.b16 %v2035, %v2035
    %v2068 = vpack.c.b16 %v2036, %v2036
    %v2069 = vpack.c.b16 %v2037, %v2037
    %v2070 = vpack.c.b16 %v2038, %v2038
    %v2071 = vpack.c.b16 %v2039, %v2039
    %v2072 = vpack.c.b16 %v2040, %v2040
    %v2073 = vpack.c.b16 %v2041, %v2041
    %v2074 = vpack.c.b16 %v2042, %v2042
    %v2075 = vpack.c.b16 %v2043, %v2043
    %v2076 = vpack.c.b16 %v2044, %v2044
    %v2077 = vpack.c.b16 %v2045, %v2045
    %v2078 = vpack.c.b16 %v2046, %v2046
    %v2079 = vpack.c.b16 %v2047, %v2047
    %v2080 = vpack.c.b16 %v2048, %v2048
    %v2081 = vpack.c.b16 %v2049, %v2049
    %v2082 = vpack.c.b16 %v2050, %v2050
    %v2083 = vpack.c.b16 %v2051, %v2051
    %v2084 = vpack.c.b16 %v2052, %v2052
    %v2085 = vpack.c.b16 %v2053, %v2053
    %v2086 = vpack.c.b16 %v2054, %v2054
    %v2087 = vpack.c.b16 %v2055, %v2055
    %v2088 = vpack.c.b16 %v2056, %v2056
    %v2089 = vpack.c.b16 %v2057, %v2057
    %v2090 = vpack.c.b16 %v2058, %v2058
    %v2091 = vpack.c.b16 %v2059, %v2059
    %v2092 = vpack.c.b16 %v2060, %v2060
    %v2093 = vpack.c.b16 %v2061, %v2061
    %v2094 = vpack.c.b16 %v2062, %v2062
    %v2095 = vpack.c.b16 %v2063, %v2063
    %v2096 = vpack.c.b16 %v2064, %v2064
    %2129 = vst [vmem:[%s7] sm:$0xf] %v2065
    %2130 = vst [vmem:[%s7 + $0x4] sm:$0xf] %v2066
    %2131 = vst [vmem:[%s7 + $0x8] sm:$0xf] %v2067
    %2132 = vst [vmem:[%s7 + $0xc] sm:$0xf] %v2068
    %2133 = vst [vmem:[%s7 + $0x10] sm:$0xf] %v2069
    %2134 = vst [vmem:[%s7 + $0x14] sm:$0xf] %v2070
    %2135 = vst [vmem:[%s7 + $0x18] sm:$0xf] %v2071
    %2136 = vst [vmem:[%s7 + $0x1c] sm:$0xf] %v2072
    %2137 = vst [vmem:[%s7 + $0x20] sm:$0xf] %v2073
    %2138 = vst [vmem:[%s7 + $0x24] sm:$0xf] %v2074
    %2139 = vst [vmem:[%s7 + $0x28] sm:$0xf] %v2075
    %2140 = vst [vmem:[%s7 + $0x2c] sm:$0xf] %v2076
    %2141 = vst [vmem:[%s7 + $0x30] sm:$0xf] %v2077
    %2142 = vst [vmem:[%s7 + $0x34] sm:$0xf] %v2078
    %2143 = vst [vmem:[%s7 + $0x38] sm:$0xf] %v2079
    %2144 = vst [vmem:[%s7 + $0x3c] sm:$0xf] %v2080
    %2145 = vst [vmem:[%s7 + $0x40] sm:$0xf] %v2081
    %2146 = vst [vmem:[%s7 + $0x44] sm:$0xf] %v2082
    %2147 = vst [vmem:[%s7 + $0x48] sm:$0xf] %v2083
    %2148 = vst [vmem:[%s7 + $0x4c] sm:$0xf] %v2084
    %2149 = vst [vmem:[%s7 + $0x50] sm:$0xf] %v2085
    %2150 = vst [vmem:[%s7 + $0x54] sm:$0xf] %v2086
    %2151 = vst [vmem:[%s7 + $0x58] sm:$0xf] %v2087
    %2152 = vst [vmem:[%s7 + $0x5c] sm:$0xf] %v2088
    %2153 = vst [vmem:[%s7 + $0x60] sm:$0xf] %v2089
    %2154 = vst [vmem:[%s7 + $0x64] sm:$0xf] %v2090
    %2155 = vst [vmem:[%s7 + $0x68] sm:$0xf] %v2091
    %2156 = vst [vmem:[%s7 + $0x6c] sm:$0xf] %v2092
    %2157 = vst [vmem:[%s7 + $0x70] sm:$0xf] %v2093
    %2158 = vst [vmem:[%s7 + $0x74] sm:$0xf] %v2094
    %2159 = vst [vmem:[%s7 + $0x78] sm:$0xf] %v2095
    %2160 = vst [vmem:[%s7 + $0x7c] sm:$0xf] %v2096
    // Predicated region
    $region34: #{ann_forward.1} parent=1 // pred_check
      _
    $region35: #{ann_forward.1} parent=1 // pred_check_branch
      %2162 = sbr.rel (0) target = $region37
    $region36: #{ann_forward.1} parent=1 // pred_region
      _
    $region37: #{ann_forward.1} parent=1 // pred_fallthru
      _
    // Predicated region
    $region38: #{ann_forward.1} parent=1 // pred_check
      _
    $region39: #{ann_forward.1} parent=1 // pred_check_branch
      %2164 = sbr.rel (0) target = $region41
    $region40: #{ann_forward.1} parent=1 // pred_region
      _
    $region41: #{ann_forward.1} parent=1 // pred_fallthru
      _
    %2165 = vsyncpa [#allocation3], 1

</llo_original>
